<compile_context>
chip_gen: v7x
topology: tpu7x:2x2x1
jax: 0.10.0
libtpu: 0.0.40
codegen_flags: <defaults>
</compile_context>

<pallas_src>
import jax
import jax.numpy as jnp
from jax import lax
from jax.experimental import pallas as pl
from jax.experimental.pallas import tpu as pltpu


def ca_kernel(x_ref, w1t_ref, w2t_ref, y_ref):
    # x_ref / y_ref: [T, Nb, C, HW] f32  (Nb batch elements per grid step)
    # w1t_ref: [C, Cr]  (Conv3d(C, Cr, 1, bias=False).weight, squeezed, transposed)
    # w2t_ref: [Cr, C]  (Conv3d(Cr, C, 1, bias=False).weight, squeezed, transposed)
    T_, Nb, C_, HW_ = x_ref.shape

    # ---- Pooling: reduce over T first (cheap VPU add/max on [Nb,C,HW] slabs),
    # then ONE cross-lane reduction over HW. Streams from the ref slab-by-slab
    # instead of binding the whole block to a single live value.
    x0 = x_ref[0]

    def pool_body(t, carry):
        s, m = carry
        xt = x_ref[t]
        return s + xt, jnp.maximum(m, xt)

    sum_slab, max_slab = lax.fori_loop(1, T_, pool_body, (x0, x0), unroll=True)

    avg = jnp.sum(sum_slab, axis=-1) * (1.0 / (T_ * HW_))       # [Nb, C]
    mx = jnp.max(max_slab, axis=-1)                             # [Nb, C]

    # ---- Shared MLP (no bias): run avg & max for all Nb batch elements through
    # one pair of small dots (2*Nb rows).
    pooled = jnp.concatenate([avg, mx], axis=0)                 # [2*Nb, C]
    h = jnp.maximum(
        jnp.dot(pooled, w1t_ref[...], preferred_element_type=jnp.float32), 0.0)  # [2*Nb, Cr]
    z = jnp.dot(h, w2t_ref[...], preferred_element_type=jnp.float32)             # [2*Nb, C]
    zsum = z[:Nb] + z[Nb:]                                      # [Nb, C]
    att = pl.reciprocal(1.0 + jnp.exp(-zsum), approx=True)      # sigmoid (exp + EUP recip)

    # ---- Scale + ReLU. Broadcast hoisted once outside the T loop; the per-t
    # store is a lane-dense (HW multiple of 128) multiply + max + vst.
    att_b = jnp.broadcast_to(att[:, :, None], (Nb, C_, HW_))

    def store_body(t, carry):
        y_ref[t] = jnp.maximum(att_b * x_ref[t], 0.0)
        return carry

    lax.fori_loop(0, T_, store_body, 0, unroll=True)


def _pick_nb(n, bytes_per_n, target_bytes=6 * 1024 * 1024):
    """Largest divisor of n whose [T, nb, C, HW] block stays under the per-block
    VMEM budget (~6 MiB => 2x double-buffered in + out ~24 MiB: safe on v7x's
    32 MiB scoped default and trivially on v5e/v6e)."""
    nb = 1
    for d in range(1, n + 1):
        if n % d == 0 and d * bytes_per_n <= target_bytes:
            nb = d
    return nb


@jax.jit
def ca_forward(x, w1, w2):
    T_, N_, C_, H_, W_ = x.shape
    HW = H_ * W_
    Cr = w1.shape[0]
    x4 = x.reshape(T_, N_, C_, HW)          # contiguous no-op
    w1t = w1.T                              # [C, Cr] (tiny, done once by XLA)
    w2t = w2.T                              # [Cr, C]

    bytes_per_n = T_ * C_ * HW * 4
    Nb = _pick_nb(N_, bytes_per_n)

    flops = 4 * T_ * N_ * C_ * HW + 8 * N_ * C_ * Cr
    bytes_accessed = 2 * x4.size * 4 + (w1.size + w2.size) * 4

    # NOTE: blocks equal the full C and HW extents, so no lane padding can
    # corrupt the max/mean pooling (padded-zeros hazard only appears if HW were
    # ever tiled below its full size).
    y = pl.pallas_call(
        ca_kernel,
        out_shape=jax.ShapeDtypeStruct((T_, N_, C_, HW), jnp.float32),
        grid_spec=pltpu.PrefetchScalarGridSpec(
            num_scalar_prefetch=0,
            grid=(N_ // Nb,),
            in_specs=[
                pl.BlockSpec((T_, Nb, C_, HW), lambda n: (0, n, 0, 0)),
                pl.BlockSpec((C_, Cr), lambda n: (0, 0)),
                pl.BlockSpec((Cr, C_), lambda n: (0, 0)),
            ],
            out_specs=pl.BlockSpec((T_, Nb, C_, HW), lambda n: (0, n, 0, 0)),
        ),
        compiler_params=pltpu.CompilerParams(
            dimension_semantics=("parallel",)),
        cost_estimate=pl.CostEstimate(
            flops=flops, transcendentals=N_ * C_, bytes_accessed=bytes_accessed),
    )(x4, w1t, w2t)
    return y.reshape(T_, N_, C_, H_, W_)


# ---------------- pure-JAX reference (for verification) ----------------
def ca_reference(x, w1, w2):
    avg = jnp.mean(x, axis=(0, 3, 4))                 # [N, C]
    mx = jnp.max(x, axis=(0, 3, 4))                   # [N, C]

    def mlp(v):
        return jnp.maximum(v @ w1.T, 0.0) @ w2.T

    att = jax.nn.sigmoid(mlp(avg) + mlp(mx))          # [N, C]
    return jnp.maximum(att[None, :, :, None, None] * x, 0.0)


if __name__ == "__main__":
    # channels must be >= c_ratio for the shared MLP bottleneck to exist
    T, N, C, H, W = 8, 2, 32, 16, 16
    c_ratio = 16
    Cr = C // c_ratio

    key = jax.random.PRNGKey(0)
    kx, k1, k2 = jax.random.split(key, 3)
    x = jax.random.normal(kx, (T, N, C, H, W), jnp.float32)
    # Conv3d(C, C//ratio, 1, bias=False).weight -> [Cr, C] (1x1x1 kernel squeezed)
    w1 = jax.random.normal(k1, (Cr, C), jnp.float32) * (1.0 / jnp.sqrt(C))
    # Conv3d(C//ratio, C, 1, bias=False).weight -> [C, Cr]
    w2 = jax.random.normal(k2, (C, Cr), jnp.float32) * (1.0 / jnp.sqrt(Cr))

    y = jax.block_until_ready(ca_forward(x, w1, w2))
    y_ref = ca_reference(x, w1, w2)

    assert y.shape == (T, N, C, H, W)
    err = float(jnp.max(jnp.abs(y - y_ref)))
    assert err < 1e-2, f"max abs err {err}"
    print("KERNEL_OK")
</pallas_src>

<mosaic_0001>
module attributes {stable_mosaic.version = 11 : i64} {
  func.func @ca_kernel(%arg0: i32, %arg1: memref<8x2x32x256xf32, #tpu.memory_space<vmem>>, %arg2: memref<32x2xf32, #tpu.memory_space<vmem>>, %arg3: memref<2x32xf32, #tpu.memory_space<vmem>>, %arg4: memref<8x2x32x256xf32, #tpu.memory_space<vmem>>) attributes {dimension_semantics = [#tpu.dimension_semantics<parallel>], iteration_bounds = array<i64: 1>, scalar_prefetch = 0 : i64, scratch_operands = 0 : i64, tpu.core_type = #tpu.core_type<tc>, window_params = [{transform_indices = @transform_0, window_bounds = array<i64: 8, 2, 32, 256>}, {pipeline_mode = #tpu.pipeline_mode<synchronous>, transform_indices = @transform_1, window_bounds = array<i64: 32, 2>}, {pipeline_mode = #tpu.pipeline_mode<synchronous>, transform_indices = @transform_2, window_bounds = array<i64: 2, 32>}, {transform_indices = @transform_3, window_bounds = array<i64: 8, 2, 32, 256>}]} {
    %c0 = arith.constant 0 : index
    %c0_0 = arith.constant 0 : index
    %c0_1 = arith.constant 0 : index
    %c0_2 = arith.constant 0 : index
    %0 = vector.load %arg1[%c0, %c0_0, %c0_1, %c0_2] : memref<8x2x32x256xf32, #tpu.memory_space<vmem>>, vector<1x2x32x256xf32>
    %1 = vector.shape_cast %0 : vector<1x2x32x256xf32> to vector<2x32x256xf32>
    %c1_i32 = arith.constant 1 : i32
    %2 = arith.index_cast %c1_i32 : i32 to index
    %c0_3 = arith.constant 0 : index
    %c0_4 = arith.constant 0 : index
    %c0_5 = arith.constant 0 : index
    %3 = vector.load %arg1[%2, %c0_3, %c0_4, %c0_5] : memref<8x2x32x256xf32, #tpu.memory_space<vmem>>, vector<1x2x32x256xf32>
    %4 = vector.shape_cast %3 : vector<1x2x32x256xf32> to vector<2x32x256xf32>
    %5 = arith.addf %1, %4 : vector<2x32x256xf32>
    %6 = arith.maximumf %1, %4 : vector<2x32x256xf32>
    %c2_i32 = arith.constant 2 : i32
    %7 = arith.index_cast %c2_i32 : i32 to index
    %c0_6 = arith.constant 0 : index
    %c0_7 = arith.constant 0 : index
    %c0_8 = arith.constant 0 : index
    %8 = vector.load %arg1[%7, %c0_6, %c0_7, %c0_8] : memref<8x2x32x256xf32, #tpu.memory_space<vmem>>, vector<1x2x32x256xf32>
    %9 = vector.shape_cast %8 : vector<1x2x32x256xf32> to vector<2x32x256xf32>
    %10 = arith.addf %5, %9 : vector<2x32x256xf32>
    %11 = arith.maximumf %6, %9 : vector<2x32x256xf32>
    %c3_i32 = arith.constant 3 : i32
    %12 = arith.index_cast %c3_i32 : i32 to index
    %c0_9 = arith.constant 0 : index
    %c0_10 = arith.constant 0 : index
    %c0_11 = arith.constant 0 : index
    %13 = vector.load %arg1[%12, %c0_9, %c0_10, %c0_11] : memref<8x2x32x256xf32, #tpu.memory_space<vmem>>, vector<1x2x32x256xf32>
    %14 = vector.shape_cast %13 : vector<1x2x32x256xf32> to vector<2x32x256xf32>
    %15 = arith.addf %10, %14 : vector<2x32x256xf32>
    %16 = arith.maximumf %11, %14 : vector<2x32x256xf32>
    %c4_i32 = arith.constant 4 : i32
    %17 = arith.index_cast %c4_i32 : i32 to index
    %c0_12 = arith.constant 0 : index
    %c0_13 = arith.constant 0 : index
    %c0_14 = arith.constant 0 : index
    %18 = vector.load %arg1[%17, %c0_12, %c0_13, %c0_14] : memref<8x2x32x256xf32, #tpu.memory_space<vmem>>, vector<1x2x32x256xf32>
    %19 = vector.shape_cast %18 : vector<1x2x32x256xf32> to vector<2x32x256xf32>
    %20 = arith.addf %15, %19 : vector<2x32x256xf32>
    %21 = arith.maximumf %16, %19 : vector<2x32x256xf32>
    %c5_i32 = arith.constant 5 : i32
    %22 = arith.index_cast %c5_i32 : i32 to index
    %c0_15 = arith.constant 0 : index
    %c0_16 = arith.constant 0 : index
    %c0_17 = arith.constant 0 : index
    %23 = vector.load %arg1[%22, %c0_15, %c0_16, %c0_17] : memref<8x2x32x256xf32, #tpu.memory_space<vmem>>, vector<1x2x32x256xf32>
    %24 = vector.shape_cast %23 : vector<1x2x32x256xf32> to vector<2x32x256xf32>
    %25 = arith.addf %20, %24 : vector<2x32x256xf32>
    %26 = arith.maximumf %21, %24 : vector<2x32x256xf32>
    %c6_i32 = arith.constant 6 : i32
    %27 = arith.index_cast %c6_i32 : i32 to index
    %c0_18 = arith.constant 0 : index
    %c0_19 = arith.constant 0 : index
    %c0_20 = arith.constant 0 : index
    %28 = vector.load %arg1[%27, %c0_18, %c0_19, %c0_20] : memref<8x2x32x256xf32, #tpu.memory_space<vmem>>, vector<1x2x32x256xf32>
    %29 = vector.shape_cast %28 : vector<1x2x32x256xf32> to vector<2x32x256xf32>
    %30 = arith.addf %25, %29 : vector<2x32x256xf32>
    %31 = arith.maximumf %26, %29 : vector<2x32x256xf32>
    %c7_i32 = arith.constant 7 : i32
    %32 = arith.index_cast %c7_i32 : i32 to index
    %c0_21 = arith.constant 0 : index
    %c0_22 = arith.constant 0 : index
    %c0_23 = arith.constant 0 : index
    %33 = vector.load %arg1[%32, %c0_21, %c0_22, %c0_23] : memref<8x2x32x256xf32, #tpu.memory_space<vmem>>, vector<1x2x32x256xf32>
    %34 = vector.shape_cast %33 : vector<1x2x32x256xf32> to vector<2x32x256xf32>
    %35 = arith.addf %30, %34 : vector<2x32x256xf32>
    %36 = arith.maximumf %31, %34 : vector<2x32x256xf32>
    %c7_i32_24 = arith.constant 7 : i32
    %cst = arith.constant dense<0.000000e+00> : vector<2x32xf32>
    %37 = vector.multi_reduction <add>, %35, %cst [2] : vector<2x32x256xf32> to vector<2x32xf32>
    %cst_25 = arith.constant 4.8828125E-4 : f32
    %38 = vector.broadcast %cst_25 : f32 to vector<2x32xf32>
    %39 = arith.mulf %37, %38 : vector<2x32xf32>
    %cst_26 = arith.constant dense<0xFF800000> : vector<2x32xf32>
    %40 = vector.multi_reduction <maximumf>, %36, %cst_26 [2] : vector<2x32x256xf32> to vector<2x32xf32>
    %41 = tpu.concatenate %39, %40 in 0 : vector<2x32xf32>, vector<2x32xf32> -> vector<4x32xf32>
    %c0_27 = arith.constant 0 : index
    %c0_28 = arith.constant 0 : index
    %42 = vector.load %arg2[%c0_27, %c0_28] : memref<32x2xf32, #tpu.memory_space<vmem>>, vector<32x2xf32>
    %cst_29 = arith.constant dense<0.000000e+00> : vector<4x2xf32>
    %43 = tpu.matmul %41, %42, %cst_29 {dimension_numbers = #tpu.dot_dimension_numbers<[1], [0], [0], [1], [0, 0, 1, 1], [], []>} : vector<4x32xf32>, vector<32x2xf32>, vector<4x2xf32> -> vector<4x2xf32>
    %cst_30 = arith.constant 0.000000e+00 : f32
    %44 = vector.broadcast %cst_30 : f32 to vector<4x2xf32>
    %45 = arith.maximumf %43, %44 : vector<4x2xf32>
    %c0_31 = arith.constant 0 : index
    %c0_32 = arith.constant 0 : index
    %46 = vector.load %arg3[%c0_31, %c0_32] : memref<2x32xf32, #tpu.memory_space<vmem>>, vector<2x32xf32>
    %cst_33 = arith.constant dense<0.000000e+00> : vector<4x32xf32>
    %47 = tpu.matmul %45, %46, %cst_33 {dimension_numbers = #tpu.dot_dimension_numbers<[1], [0], [0], [1], [0, 0, 1, 1], [], []>} : vector<4x2xf32>, vector<2x32xf32>, vector<4x32xf32> -> vector<4x32xf32>
    %48 = vector.extract_strided_slice %47 {offsets = [0, 0], sizes = [2, 32], strides = [1, 1]} : vector<4x32xf32> to vector<2x32xf32>
    %49 = vector.extract_strided_slice %47 {offsets = [2, 0], sizes = [2, 32], strides = [1, 1]} : vector<4x32xf32> to vector<2x32xf32>
    %50 = arith.addf %48, %49 : vector<2x32xf32>
    %cst_34 = arith.constant 0.000000e+00 : f32
    %51 = vector.broadcast %cst_34 : f32 to vector<2x32xf32>
    %52 = arith.subf %51, %50 : vector<2x32xf32>
    %53 = math.exp %52 : vector<2x32xf32>
    %cst_35 = arith.constant 1.000000e+00 : f32
    %54 = vector.broadcast %cst_35 : f32 to vector<2x32xf32>
    %55 = arith.addf %54, %53 : vector<2x32xf32>
    %56 = tpu.reciprocal %55 {approx = true} : vector<2x32xf32> -> vector<2x32xf32>
    %57 = vector.shape_cast %56 : vector<2x32xf32> to vector<2x32x1xf32>
    %58 = vector.shape_cast %57 : vector<2x32x1xf32> to vector<2x32x1xf32>
    %59 = vector.broadcast %58 : vector<2x32x1xf32> to vector<2x32x256xf32>
    %c0_i32 = arith.constant 0 : i32
    %60 = arith.index_cast %c0_i32 : i32 to index
    %c0_36 = arith.constant 0 : index
    %c0_37 = arith.constant 0 : index
    %c0_38 = arith.constant 0 : index
    %61 = vector.load %arg1[%60, %c0_36, %c0_37, %c0_38] : memref<8x2x32x256xf32, #tpu.memory_space<vmem>>, vector<1x2x32x256xf32>
    %62 = vector.shape_cast %61 : vector<1x2x32x256xf32> to vector<2x32x256xf32>
    %63 = arith.mulf %59, %62 : vector<2x32x256xf32>
    %cst_39 = arith.constant 0.000000e+00 : f32
    %64 = vector.broadcast %cst_39 : f32 to vector<2x32x256xf32>
    %65 = arith.maximumf %63, %64 : vector<2x32x256xf32>
    %66 = arith.index_cast %c0_i32 : i32 to index
    %c0_40 = arith.constant 0 : index
    %c0_41 = arith.constant 0 : index
    %c0_42 = arith.constant 0 : index
    %67 = vector.load %arg4[%66, %c0_40, %c0_41, %c0_42] : memref<8x2x32x256xf32, #tpu.memory_space<vmem>>, vector<1x2x32x256xf32>
    %68 = vector.shape_cast %67 : vector<1x2x32x256xf32> to vector<2x32x256xf32>
    %69 = vector.shape_cast %65 : vector<2x32x256xf32> to vector<1x2x32x256xf32>
    tpu.vector_store %arg4[%66, %c0_40, %c0_41, %c0_42], %69 {strides = array<i32>} : memref<8x2x32x256xf32, #tpu.memory_space<vmem>>, vector<1x2x32x256xf32>,
    %c1_i32_43 = arith.constant 1 : i32
    %70 = arith.index_cast %c1_i32_43 : i32 to index
    %c0_44 = arith.constant 0 : index
    %c0_45 = arith.constant 0 : index
    %c0_46 = arith.constant 0 : index
    %71 = vector.load %arg1[%70, %c0_44, %c0_45, %c0_46] : memref<8x2x32x256xf32, #tpu.memory_space<vmem>>, vector<1x2x32x256xf32>
    %72 = vector.shape_cast %71 : vector<1x2x32x256xf32> to vector<2x32x256xf32>
    %73 = arith.mulf %59, %72 : vector<2x32x256xf32>
    %cst_47 = arith.constant 0.000000e+00 : f32
    %74 = vector.broadcast %cst_47 : f32 to vector<2x32x256xf32>
    %75 = arith.maximumf %73, %74 : vector<2x32x256xf32>
    %76 = arith.index_cast %c1_i32_43 : i32 to index
    %c0_48 = arith.constant 0 : index
    %c0_49 = arith.constant 0 : index
    %c0_50 = arith.constant 0 : index
    %77 = vector.load %arg4[%76, %c0_48, %c0_49, %c0_50] : memref<8x2x32x256xf32, #tpu.memory_space<vmem>>, vector<1x2x32x256xf32>
    %78 = vector.shape_cast %77 : vector<1x2x32x256xf32> to vector<2x32x256xf32>
    %79 = vector.shape_cast %75 : vector<2x32x256xf32> to vector<1x2x32x256xf32>
    tpu.vector_store %arg4[%76, %c0_48, %c0_49, %c0_50], %79 {strides = array<i32>} : memref<8x2x32x256xf32, #tpu.memory_space<vmem>>, vector<1x2x32x256xf32>,
    %c2_i32_51 = arith.constant 2 : i32
    %80 = arith.index_cast %c2_i32_51 : i32 to index
    %c0_52 = arith.constant 0 : index
    %c0_53 = arith.constant 0 : index
    %c0_54 = arith.constant 0 : index
    %81 = vector.load %arg1[%80, %c0_52, %c0_53, %c0_54] : memref<8x2x32x256xf32, #tpu.memory_space<vmem>>, vector<1x2x32x256xf32>
    %82 = vector.shape_cast %81 : vector<1x2x32x256xf32> to vector<2x32x256xf32>
    %83 = arith.mulf %59, %82 : vector<2x32x256xf32>
    %cst_55 = arith.constant 0.000000e+00 : f32
    %84 = vector.broadcast %cst_55 : f32 to vector<2x32x256xf32>
    %85 = arith.maximumf %83, %84 : vector<2x32x256xf32>
    %86 = arith.index_cast %c2_i32_51 : i32 to index
    %c0_56 = arith.constant 0 : index
    %c0_57 = arith.constant 0 : index
    %c0_58 = arith.constant 0 : index
    %87 = vector.load %arg4[%86, %c0_56, %c0_57, %c0_58] : memref<8x2x32x256xf32, #tpu.memory_space<vmem>>, vector<1x2x32x256xf32>
    %88 = vector.shape_cast %87 : vector<1x2x32x256xf32> to vector<2x32x256xf32>
    %89 = vector.shape_cast %85 : vector<2x32x256xf32> to vector<1x2x32x256xf32>
    tpu.vector_store %arg4[%86, %c0_56, %c0_57, %c0_58], %89 {strides = array<i32>} : memref<8x2x32x256xf32, #tpu.memory_space<vmem>>, vector<1x2x32x256xf32>,
    %c3_i32_59 = arith.constant 3 : i32
    %90 = arith.index_cast %c3_i32_59 : i32 to index
    %c0_60 = arith.constant 0 : index
    %c0_61 = arith.constant 0 : index
    %c0_62 = arith.constant 0 : index
    %91 = vector.load %arg1[%90, %c0_60, %c0_61, %c0_62] : memref<8x2x32x256xf32, #tpu.memory_space<vmem>>, vector<1x2x32x256xf32>
    %92 = vector.shape_cast %91 : vector<1x2x32x256xf32> to vector<2x32x256xf32>
    %93 = arith.mulf %59, %92 : vector<2x32x256xf32>
    %cst_63 = arith.constant 0.000000e+00 : f32
    %94 = vector.broadcast %cst_63 : f32 to vector<2x32x256xf32>
    %95 = arith.maximumf %93, %94 : vector<2x32x256xf32>
    %96 = arith.index_cast %c3_i32_59 : i32 to index
    %c0_64 = arith.constant 0 : index
    %c0_65 = arith.constant 0 : index
    %c0_66 = arith.constant 0 : index
    %97 = vector.load %arg4[%96, %c0_64, %c0_65, %c0_66] : memref<8x2x32x256xf32, #tpu.memory_space<vmem>>, vector<1x2x32x256xf32>
    %98 = vector.shape_cast %97 : vector<1x2x32x256xf32> to vector<2x32x256xf32>
    %99 = vector.shape_cast %95 : vector<2x32x256xf32> to vector<1x2x32x256xf32>
    tpu.vector_store %arg4[%96, %c0_64, %c0_65, %c0_66], %99 {strides = array<i32>} : memref<8x2x32x256xf32, #tpu.memory_space<vmem>>, vector<1x2x32x256xf32>,
    %c4_i32_67 = arith.constant 4 : i32
    %100 = arith.index_cast %c4_i32_67 : i32 to index
    %c0_68 = arith.constant 0 : index
    %c0_69 = arith.constant 0 : index
    %c0_70 = arith.constant 0 : index
    %101 = vector.load %arg1[%100, %c0_68, %c0_69, %c0_70] : memref<8x2x32x256xf32, #tpu.memory_space<vmem>>, vector<1x2x32x256xf32>
    %102 = vector.shape_cast %101 : vector<1x2x32x256xf32> to vector<2x32x256xf32>
    %103 = arith.mulf %59, %102 : vector<2x32x256xf32>
    %cst_71 = arith.constant 0.000000e+00 : f32
    %104 = vector.broadcast %cst_71 : f32 to vector<2x32x256xf32>
    %105 = arith.maximumf %103, %104 : vector<2x32x256xf32>
    %106 = arith.index_cast %c4_i32_67 : i32 to index
    %c0_72 = arith.constant 0 : index
    %c0_73 = arith.constant 0 : index
    %c0_74 = arith.constant 0 : index
    %107 = vector.load %arg4[%106, %c0_72, %c0_73, %c0_74] : memref<8x2x32x256xf32, #tpu.memory_space<vmem>>, vector<1x2x32x256xf32>
    %108 = vector.shape_cast %107 : vector<1x2x32x256xf32> to vector<2x32x256xf32>
    %109 = vector.shape_cast %105 : vector<2x32x256xf32> to vector<1x2x32x256xf32>
    tpu.vector_store %arg4[%106, %c0_72, %c0_73, %c0_74], %109 {strides = array<i32>} : memref<8x2x32x256xf32, #tpu.memory_space<vmem>>, vector<1x2x32x256xf32>,
    %c5_i32_75 = arith.constant 5 : i32
    %110 = arith.index_cast %c5_i32_75 : i32 to index
    %c0_76 = arith.constant 0 : index
    %c0_77 = arith.constant 0 : index
    %c0_78 = arith.constant 0 : index
    %111 = vector.load %arg1[%110, %c0_76, %c0_77, %c0_78] : memref<8x2x32x256xf32, #tpu.memory_space<vmem>>, vector<1x2x32x256xf32>
    %112 = vector.shape_cast %111 : vector<1x2x32x256xf32> to vector<2x32x256xf32>
    %113 = arith.mulf %59, %112 : vector<2x32x256xf32>
    %cst_79 = arith.constant 0.000000e+00 : f32
    %114 = vector.broadcast %cst_79 : f32 to vector<2x32x256xf32>
    %115 = arith.maximumf %113, %114 : vector<2x32x256xf32>
    %116 = arith.index_cast %c5_i32_75 : i32 to index
    %c0_80 = arith.constant 0 : index
    %c0_81 = arith.constant 0 : index
    %c0_82 = arith.constant 0 : index
    %117 = vector.load %arg4[%116, %c0_80, %c0_81, %c0_82] : memref<8x2x32x256xf32, #tpu.memory_space<vmem>>, vector<1x2x32x256xf32>
    %118 = vector.shape_cast %117 : vector<1x2x32x256xf32> to vector<2x32x256xf32>
    %119 = vector.shape_cast %115 : vector<2x32x256xf32> to vector<1x2x32x256xf32>
    tpu.vector_store %arg4[%116, %c0_80, %c0_81, %c0_82], %119 {strides = array<i32>} : memref<8x2x32x256xf32, #tpu.memory_space<vmem>>, vector<1x2x32x256xf32>,
    %c6_i32_83 = arith.constant 6 : i32
    %120 = arith.index_cast %c6_i32_83 : i32 to index
    %c0_84 = arith.constant 0 : index
    %c0_85 = arith.constant 0 : index
    %c0_86 = arith.constant 0 : index
    %121 = vector.load %arg1[%120, %c0_84, %c0_85, %c0_86] : memref<8x2x32x256xf32, #tpu.memory_space<vmem>>, vector<1x2x32x256xf32>
    %122 = vector.shape_cast %121 : vector<1x2x32x256xf32> to vector<2x32x256xf32>
    %123 = arith.mulf %59, %122 : vector<2x32x256xf32>
    %cst_87 = arith.constant 0.000000e+00 : f32
    %124 = vector.broadcast %cst_87 : f32 to vector<2x32x256xf32>
    %125 = arith.maximumf %123, %124 : vector<2x32x256xf32>
    %126 = arith.index_cast %c6_i32_83 : i32 to index
    %c0_88 = arith.constant 0 : index
    %c0_89 = arith.constant 0 : index
    %c0_90 = arith.constant 0 : index
    %127 = vector.load %arg4[%126, %c0_88, %c0_89, %c0_90] : memref<8x2x32x256xf32, #tpu.memory_space<vmem>>, vector<1x2x32x256xf32>
    %128 = vector.shape_cast %127 : vector<1x2x32x256xf32> to vector<2x32x256xf32>
    %129 = vector.shape_cast %125 : vector<2x32x256xf32> to vector<1x2x32x256xf32>
    tpu.vector_store %arg4[%126, %c0_88, %c0_89, %c0_90], %129 {strides = array<i32>} : memref<8x2x32x256xf32, #tpu.memory_space<vmem>>, vector<1x2x32x256xf32>,
    %c7_i32_91 = arith.constant 7 : i32
    %130 = arith.index_cast %c7_i32_91 : i32 to index
    %c0_92 = arith.constant 0 : index
    %c0_93 = arith.constant 0 : index
    %c0_94 = arith.constant 0 : index
    %131 = vector.load %arg1[%130, %c0_92, %c0_93, %c0_94] : memref<8x2x32x256xf32, #tpu.memory_space<vmem>>, vector<1x2x32x256xf32>
    %132 = vector.shape_cast %131 : vector<1x2x32x256xf32> to vector<2x32x256xf32>
    %133 = arith.mulf %59, %132 : vector<2x32x256xf32>
    %cst_95 = arith.constant 0.000000e+00 : f32
    %134 = vector.broadcast %cst_95 : f32 to vector<2x32x256xf32>
    %135 = arith.maximumf %133, %134 : vector<2x32x256xf32>
    %136 = arith.index_cast %c7_i32_91 : i32 to index
    %c0_96 = arith.constant 0 : index
    %c0_97 = arith.constant 0 : index
    %c0_98 = arith.constant 0 : index
    %137 = vector.load %arg4[%136, %c0_96, %c0_97, %c0_98] : memref<8x2x32x256xf32, #tpu.memory_space<vmem>>, vector<1x2x32x256xf32>
    %138 = vector.shape_cast %137 : vector<1x2x32x256xf32> to vector<2x32x256xf32>
    %139 = vector.shape_cast %135 : vector<2x32x256xf32> to vector<1x2x32x256xf32>
    tpu.vector_store %arg4[%136, %c0_96, %c0_97, %c0_98], %139 {strides = array<i32>} : memref<8x2x32x256xf32, #tpu.memory_space<vmem>>, vector<1x2x32x256xf32>,
    %c8_i32 = arith.constant 8 : i32
    return
  }
  func.func @transform_0(%arg0: i32) -> (i32, i32, i32, i32) {
    %c0_i32 = arith.constant 0 : i32
    %c0_i32_0 = arith.constant 0 : i32
    %c0_i32_1 = arith.constant 0 : i32
    %c0_i32_2 = arith.constant 0 : i32
    return %c0_i32, %arg0, %c0_i32_0, %c0_i32_1 : i32, i32, i32, i32
  }
  func.func @transform_1(%arg0: i32) -> (i32, i32) {
    %c0_i32 = arith.constant 0 : i32
    %c0_i32_0 = arith.constant 0 : i32
    %c0_i32_1 = arith.constant 0 : i32
    return %c0_i32, %c0_i32_0 : i32, i32
  }
  func.func @transform_2(%arg0: i32) -> (i32, i32) {
    %c0_i32 = arith.constant 0 : i32
    %c0_i32_0 = arith.constant 0 : i32
    %c0_i32_1 = arith.constant 0 : i32
    return %c0_i32, %c0_i32_0 : i32, i32
  }
  func.func @transform_3(%arg0: i32) -> (i32, i32, i32, i32) {
    %c0_i32 = arith.constant 0 : i32
    %c0_i32_0 = arith.constant 0 : i32
    %c0_i32_1 = arith.constant 0 : i32
    %c0_i32_2 = arith.constant 0 : i32
    return %c0_i32, %arg0, %c0_i32_0, %c0_i32_1 : i32, i32, i32, i32
  }
}

</mosaic_0001>

<llo_original>
// kernel: ca_forward.1
$region0: #{ca_forward.1}
  #allocation0 [shape = 'u32[]', space=smem, size = 0x4, offset = 0x4, fixed_abs, tag = 'smem constant byte address 0x4 - core index']
  #allocation1 [shape = 'u32[144,128]{1,0:T(1,128)}', space=vmem, size = 0x12000, scoped, tag = 'internal scratch']
  %s0 = inlined_call_operand.vmem [shape: f32[8,2,32,256], index: 0, kind: input, shape index: {}]
  %s1 = inlined_call_operand.vmem [shape: f32[32,2], index: 1, kind: input, shape index: {}]
  %s2 = inlined_call_operand.vmem [shape: f32[2,32], index: 2, kind: input, shape index: {}]
  %s3 = inlined_call_operand.vmem [shape: f32[8,2,32,256], index: 3, kind: output, shape index: {}]
  %s4 = sld [smem:[#allocation0]]
  $region22: #{ca_forward.1} parent=0
    _
  %s6 = ssub.s32 1, %s4
  %s7 = scalar_select 0, %s6, %s4
  // Predicated region
  $region2: #{ca_forward.1} parent=0 // pred_check
    _
  $region3: #{ca_forward.1} parent=0 // pred_check_branch
    %9 = sbr.rel (0) target = $region5
  $region4: #{ca_forward.1} parent=0 // pred_region
    _
  $region5: #{ca_forward.1} parent=0 // pred_fallthru
    _
  // Predicated region
  $region6: #{ca_forward.1} parent=0 // pred_check
    _
  $region7: #{ca_forward.1} parent=0 // pred_check_branch
    %11 = sbr.rel (0) target = $region9
  $region8: #{ca_forward.1} parent=0 // pred_region
    _
  $region9: #{ca_forward.1} parent=0 // pred_fallthru
    _
  // Predicated region
  $region10: #{ca_forward.1} parent=0 // pred_check
    _
  $region11: #{ca_forward.1} parent=0 // pred_check_branch
    %13 = sbr.rel (0) target = $region13
  $region12: #{ca_forward.1} parent=0 // pred_region
    _
  $region13: #{ca_forward.1} parent=0 // pred_fallthru
    _
  %v14 = vld [vmem:[%s0] sm:$0xff]
  %v15 = vld [vmem:[%s0 + $0x8] sm:$0xff]
  %v16 = vld [vmem:[%s0 + $0x10] sm:$0xff]
  %v17 = vld [vmem:[%s0 + $0x18] sm:$0xff]
  %v18 = vld [vmem:[%s0 + $0x20] sm:$0xff]
  %v19 = vld [vmem:[%s0 + $0x28] sm:$0xff]
  %v20 = vld [vmem:[%s0 + $0x30] sm:$0xff]
  %v21 = vld [vmem:[%s0 + $0x38] sm:$0xff]
  %v22 = vld [vmem:[%s0 + $0x40] sm:$0xff]
  %v23 = vld [vmem:[%s0 + $0x48] sm:$0xff]
  %v24 = vld [vmem:[%s0 + $0x50] sm:$0xff]
  %v25 = vld [vmem:[%s0 + $0x58] sm:$0xff]
  %v26 = vld [vmem:[%s0 + $0x60] sm:$0xff]
  %v27 = vld [vmem:[%s0 + $0x68] sm:$0xff]
  %v28 = vld [vmem:[%s0 + $0x70] sm:$0xff]
  %v29 = vld [vmem:[%s0 + $0x78] sm:$0xff]
  %s30 = scalar_lea.vmem %s0, 128
  %v31 = vld [vmem:[%s30] sm:$0xff]
  %v32 = vld [vmem:[%s30 + $0x8] sm:$0xff]
  %v33 = vld [vmem:[%s30 + $0x10] sm:$0xff]
  %v34 = vld [vmem:[%s30 + $0x18] sm:$0xff]
  %v35 = vld [vmem:[%s30 + $0x20] sm:$0xff]
  %v36 = vld [vmem:[%s30 + $0x28] sm:$0xff]
  %v37 = vld [vmem:[%s30 + $0x30] sm:$0xff]
  %v38 = vld [vmem:[%s30 + $0x38] sm:$0xff]
  %v39 = vld [vmem:[%s30 + $0x40] sm:$0xff]
  %v40 = vld [vmem:[%s30 + $0x48] sm:$0xff]
  %v41 = vld [vmem:[%s30 + $0x50] sm:$0xff]
  %v42 = vld [vmem:[%s30 + $0x58] sm:$0xff]
  %v43 = vld [vmem:[%s30 + $0x60] sm:$0xff]
  %v44 = vld [vmem:[%s30 + $0x68] sm:$0xff]
  %v45 = vld [vmem:[%s30 + $0x70] sm:$0xff]
  %v46 = vld [vmem:[%s30 + $0x78] sm:$0xff]
  %v47 = vadd.f32 %v14, %v31
  %v48 = vadd.f32 %v15, %v32
  %v49 = vadd.f32 %v16, %v33
  %v50 = vadd.f32 %v17, %v34
  %v51 = vadd.f32 %v18, %v35
  %v52 = vadd.f32 %v19, %v36
  %v53 = vadd.f32 %v20, %v37
  %v54 = vadd.f32 %v21, %v38
  %v55 = vadd.f32 %v22, %v39
  %v56 = vadd.f32 %v23, %v40
  %v57 = vadd.f32 %v24, %v41
  %v58 = vadd.f32 %v25, %v42
  %v59 = vadd.f32 %v26, %v43
  %v60 = vadd.f32 %v27, %v44
  %v61 = vadd.f32 %v28, %v45
  %v62 = vadd.f32 %v29, %v46
  %v63 = vmax.f32 %v14, %v31
  %v64 = vmax.f32 %v15, %v32
  %v65 = vmax.f32 %v16, %v33
  %v66 = vmax.f32 %v17, %v34
  %v67 = vmax.f32 %v18, %v35
  %v68 = vmax.f32 %v19, %v36
  %v69 = vmax.f32 %v20, %v37
  %v70 = vmax.f32 %v21, %v38
  %v71 = vmax.f32 %v22, %v39
  %v72 = vmax.f32 %v23, %v40
  %v73 = vmax.f32 %v24, %v41
  %v74 = vmax.f32 %v25, %v42
  %v75 = vmax.f32 %v26, %v43
  %v76 = vmax.f32 %v27, %v44
  %v77 = vmax.f32 %v28, %v45
  %v78 = vmax.f32 %v29, %v46
  %s79 = scalar_lea.vmem %s0, 256
  %v80 = vld [vmem:[%s79] sm:$0xff]
  %v81 = vld [vmem:[%s79 + $0x8] sm:$0xff]
  %v82 = vld [vmem:[%s79 + $0x10] sm:$0xff]
  %v83 = vld [vmem:[%s79 + $0x18] sm:$0xff]
  %v84 = vld [vmem:[%s79 + $0x20] sm:$0xff]
  %v85 = vld [vmem:[%s79 + $0x28] sm:$0xff]
  %v86 = vld [vmem:[%s79 + $0x30] sm:$0xff]
  %v87 = vld [vmem:[%s79 + $0x38] sm:$0xff]
  %v88 = vld [vmem:[%s79 + $0x40] sm:$0xff]
  %v89 = vld [vmem:[%s79 + $0x48] sm:$0xff]
  %v90 = vld [vmem:[%s79 + $0x50] sm:$0xff]
  %v91 = vld [vmem:[%s79 + $0x58] sm:$0xff]
  %v92 = vld [vmem:[%s79 + $0x60] sm:$0xff]
  %v93 = vld [vmem:[%s79 + $0x68] sm:$0xff]
  %v94 = vld [vmem:[%s79 + $0x70] sm:$0xff]
  %v95 = vld [vmem:[%s79 + $0x78] sm:$0xff]
  %v96 = vadd.f32 %v47, %v80
  %v97 = vadd.f32 %v48, %v81
  %v98 = vadd.f32 %v49, %v82
  %v99 = vadd.f32 %v50, %v83
  %v100 = vadd.f32 %v51, %v84
  %v101 = vadd.f32 %v52, %v85
  %v102 = vadd.f32 %v53, %v86
  %v103 = vadd.f32 %v54, %v87
  %v104 = vadd.f32 %v55, %v88
  %v105 = vadd.f32 %v56, %v89
  %v106 = vadd.f32 %v57, %v90
  %v107 = vadd.f32 %v58, %v91
  %v108 = vadd.f32 %v59, %v92
  %v109 = vadd.f32 %v60, %v93
  %v110 = vadd.f32 %v61, %v94
  %v111 = vadd.f32 %v62, %v95
  %v112 = vmax.f32 %v63, %v80
  %v113 = vmax.f32 %v64, %v81
  %v114 = vmax.f32 %v65, %v82
  %v115 = vmax.f32 %v66, %v83
  %v116 = vmax.f32 %v67, %v84
  %v117 = vmax.f32 %v68, %v85
  %v118 = vmax.f32 %v69, %v86
  %v119 = vmax.f32 %v70, %v87
  %v120 = vmax.f32 %v71, %v88
  %v121 = vmax.f32 %v72, %v89
  %v122 = vmax.f32 %v73, %v90
  %v123 = vmax.f32 %v74, %v91
  %v124 = vmax.f32 %v75, %v92
  %v125 = vmax.f32 %v76, %v93
  %v126 = vmax.f32 %v77, %v94
  %v127 = vmax.f32 %v78, %v95
  %s128 = scalar_lea.vmem %s0, 384
  %v129 = vld [vmem:[%s128] sm:$0xff]
  %v130 = vld [vmem:[%s128 + $0x8] sm:$0xff]
  %v131 = vld [vmem:[%s128 + $0x10] sm:$0xff]
  %v132 = vld [vmem:[%s128 + $0x18] sm:$0xff]
  %v133 = vld [vmem:[%s128 + $0x20] sm:$0xff]
  %v134 = vld [vmem:[%s128 + $0x28] sm:$0xff]
  %v135 = vld [vmem:[%s128 + $0x30] sm:$0xff]
  %v136 = vld [vmem:[%s128 + $0x38] sm:$0xff]
  %v137 = vld [vmem:[%s128 + $0x40] sm:$0xff]
  %v138 = vld [vmem:[%s128 + $0x48] sm:$0xff]
  %v139 = vld [vmem:[%s128 + $0x50] sm:$0xff]
  %v140 = vld [vmem:[%s128 + $0x58] sm:$0xff]
  %v141 = vld [vmem:[%s128 + $0x60] sm:$0xff]
  %v142 = vld [vmem:[%s128 + $0x68] sm:$0xff]
  %v143 = vld [vmem:[%s128 + $0x70] sm:$0xff]
  %v144 = vld [vmem:[%s128 + $0x78] sm:$0xff]
  %v145 = vadd.f32 %v96, %v129
  %v146 = vadd.f32 %v97, %v130
  %v147 = vadd.f32 %v98, %v131
  %v148 = vadd.f32 %v99, %v132
  %v149 = vadd.f32 %v100, %v133
  %v150 = vadd.f32 %v101, %v134
  %v151 = vadd.f32 %v102, %v135
  %v152 = vadd.f32 %v103, %v136
  %v153 = vadd.f32 %v104, %v137
  %v154 = vadd.f32 %v105, %v138
  %v155 = vadd.f32 %v106, %v139
  %v156 = vadd.f32 %v107, %v140
  %v157 = vadd.f32 %v108, %v141
  %v158 = vadd.f32 %v109, %v142
  %v159 = vadd.f32 %v110, %v143
  %v160 = vadd.f32 %v111, %v144
  %v161 = vmax.f32 %v112, %v129
  %v162 = vmax.f32 %v113, %v130
  %v163 = vmax.f32 %v114, %v131
  %v164 = vmax.f32 %v115, %v132
  %v165 = vmax.f32 %v116, %v133
  %v166 = vmax.f32 %v117, %v134
  %v167 = vmax.f32 %v118, %v135
  %v168 = vmax.f32 %v119, %v136
  %v169 = vmax.f32 %v120, %v137
  %v170 = vmax.f32 %v121, %v138
  %v171 = vmax.f32 %v122, %v139
  %v172 = vmax.f32 %v123, %v140
  %v173 = vmax.f32 %v124, %v141
  %v174 = vmax.f32 %v125, %v142
  %v175 = vmax.f32 %v126, %v143
  %v176 = vmax.f32 %v127, %v144
  %s177 = scalar_lea.vmem %s0, 512
  %v178 = vld [vmem:[%s177] sm:$0xff]
  %v179 = vld [vmem:[%s177 + $0x8] sm:$0xff]
  %v180 = vld [vmem:[%s177 + $0x10] sm:$0xff]
  %v181 = vld [vmem:[%s177 + $0x18] sm:$0xff]
  %v182 = vld [vmem:[%s177 + $0x20] sm:$0xff]
  %v183 = vld [vmem:[%s177 + $0x28] sm:$0xff]
  %v184 = vld [vmem:[%s177 + $0x30] sm:$0xff]
  %v185 = vld [vmem:[%s177 + $0x38] sm:$0xff]
  %v186 = vld [vmem:[%s177 + $0x40] sm:$0xff]
  %v187 = vld [vmem:[%s177 + $0x48] sm:$0xff]
  %v188 = vld [vmem:[%s177 + $0x50] sm:$0xff]
  %v189 = vld [vmem:[%s177 + $0x58] sm:$0xff]
  %v190 = vld [vmem:[%s177 + $0x60] sm:$0xff]
  %v191 = vld [vmem:[%s177 + $0x68] sm:$0xff]
  %v192 = vld [vmem:[%s177 + $0x70] sm:$0xff]
  %v193 = vld [vmem:[%s177 + $0x78] sm:$0xff]
  %v194 = vadd.f32 %v145, %v178
  %v195 = vadd.f32 %v146, %v179
  %v196 = vadd.f32 %v147, %v180
  %v197 = vadd.f32 %v148, %v181
  %v198 = vadd.f32 %v149, %v182
  %v199 = vadd.f32 %v150, %v183
  %v200 = vadd.f32 %v151, %v184
  %v201 = vadd.f32 %v152, %v185
  %v202 = vadd.f32 %v153, %v186
  %v203 = vadd.f32 %v154, %v187
  %v204 = vadd.f32 %v155, %v188
  %v205 = vadd.f32 %v156, %v189
  %v206 = vadd.f32 %v157, %v190
  %v207 = vadd.f32 %v158, %v191
  %v208 = vadd.f32 %v159, %v192
  %v209 = vadd.f32 %v160, %v193
  %v210 = vmax.f32 %v161, %v178
  %v211 = vmax.f32 %v162, %v179
  %v212 = vmax.f32 %v163, %v180
  %v213 = vmax.f32 %v164, %v181
  %v214 = vmax.f32 %v165, %v182
  %v215 = vmax.f32 %v166, %v183
  %v216 = vmax.f32 %v167, %v184
  %v217 = vmax.f32 %v168, %v185
  %v218 = vmax.f32 %v169, %v186
  %v219 = vmax.f32 %v170, %v187
  %v220 = vmax.f32 %v171, %v188
  %v221 = vmax.f32 %v172, %v189
  %v222 = vmax.f32 %v173, %v190
  %v223 = vmax.f32 %v174, %v191
  %v224 = vmax.f32 %v175, %v192
  %v225 = vmax.f32 %v176, %v193
  %s226 = scalar_lea.vmem %s0, 640
  %v227 = vld [vmem:[%s226] sm:$0xff]
  %v228 = vld [vmem:[%s226 + $0x8] sm:$0xff]
  %v229 = vld [vmem:[%s226 + $0x10] sm:$0xff]
  %v230 = vld [vmem:[%s226 + $0x18] sm:$0xff]
  %v231 = vld [vmem:[%s226 + $0x20] sm:$0xff]
  %v232 = vld [vmem:[%s226 + $0x28] sm:$0xff]
  %v233 = vld [vmem:[%s226 + $0x30] sm:$0xff]
  %v234 = vld [vmem:[%s226 + $0x38] sm:$0xff]
  %v235 = vld [vmem:[%s226 + $0x40] sm:$0xff]
  %v236 = vld [vmem:[%s226 + $0x48] sm:$0xff]
  %v237 = vld [vmem:[%s226 + $0x50] sm:$0xff]
  %v238 = vld [vmem:[%s226 + $0x58] sm:$0xff]
  %v239 = vld [vmem:[%s226 + $0x60] sm:$0xff]
  %v240 = vld [vmem:[%s226 + $0x68] sm:$0xff]
  %v241 = vld [vmem:[%s226 + $0x70] sm:$0xff]
  %v242 = vld [vmem:[%s226 + $0x78] sm:$0xff]
  %v243 = vadd.f32 %v194, %v227
  %v244 = vadd.f32 %v195, %v228
  %v245 = vadd.f32 %v196, %v229
  %v246 = vadd.f32 %v197, %v230
  %v247 = vadd.f32 %v198, %v231
  %v248 = vadd.f32 %v199, %v232
  %v249 = vadd.f32 %v200, %v233
  %v250 = vadd.f32 %v201, %v234
  %v251 = vadd.f32 %v202, %v235
  %v252 = vadd.f32 %v203, %v236
  %v253 = vadd.f32 %v204, %v237
  %v254 = vadd.f32 %v205, %v238
  %v255 = vadd.f32 %v206, %v239
  %v256 = vadd.f32 %v207, %v240
  %v257 = vadd.f32 %v208, %v241
  %v258 = vadd.f32 %v209, %v242
  %v259 = vmax.f32 %v210, %v227
  %v260 = vmax.f32 %v211, %v228
  %v261 = vmax.f32 %v212, %v229
  %v262 = vmax.f32 %v213, %v230
  %v263 = vmax.f32 %v214, %v231
  %v264 = vmax.f32 %v215, %v232
  %v265 = vmax.f32 %v216, %v233
  %v266 = vmax.f32 %v217, %v234
  %v267 = vmax.f32 %v218, %v235
  %v268 = vmax.f32 %v219, %v236
  %v269 = vmax.f32 %v220, %v237
  %v270 = vmax.f32 %v221, %v238
  %v271 = vmax.f32 %v222, %v239
  %v272 = vmax.f32 %v223, %v240
  %v273 = vmax.f32 %v224, %v241
  %v274 = vmax.f32 %v225, %v242
  %s275 = scalar_lea.vmem %s0, 768
  %v276 = vld [vmem:[%s275] sm:$0xff]
  %v277 = vld [vmem:[%s275 + $0x8] sm:$0xff]
  %v278 = vld [vmem:[%s275 + $0x10] sm:$0xff]
  %v279 = vld [vmem:[%s275 + $0x18] sm:$0xff]
  %v280 = vld [vmem:[%s275 + $0x20] sm:$0xff]
  %v281 = vld [vmem:[%s275 + $0x28] sm:$0xff]
  %v282 = vld [vmem:[%s275 + $0x30] sm:$0xff]
  %v283 = vld [vmem:[%s275 + $0x38] sm:$0xff]
  %v284 = vld [vmem:[%s275 + $0x40] sm:$0xff]
  %v285 = vld [vmem:[%s275 + $0x48] sm:$0xff]
  %v286 = vld [vmem:[%s275 + $0x50] sm:$0xff]
  %v287 = vld [vmem:[%s275 + $0x58] sm:$0xff]
  %v288 = vld [vmem:[%s275 + $0x60] sm:$0xff]
  %v289 = vld [vmem:[%s275 + $0x68] sm:$0xff]
  %v290 = vld [vmem:[%s275 + $0x70] sm:$0xff]
  %v291 = vld [vmem:[%s275 + $0x78] sm:$0xff]
  %v292 = vadd.f32 %v243, %v276
  %v293 = vadd.f32 %v244, %v277
  %v294 = vadd.f32 %v245, %v278
  %v295 = vadd.f32 %v246, %v279
  %v296 = vadd.f32 %v247, %v280
  %v297 = vadd.f32 %v248, %v281
  %v298 = vadd.f32 %v249, %v282
  %v299 = vadd.f32 %v250, %v283
  %v300 = vadd.f32 %v251, %v284
  %v301 = vadd.f32 %v252, %v285
  %v302 = vadd.f32 %v253, %v286
  %v303 = vadd.f32 %v254, %v287
  %v304 = vadd.f32 %v255, %v288
  %v305 = vadd.f32 %v256, %v289
  %v306 = vadd.f32 %v257, %v290
  %v307 = vadd.f32 %v258, %v291
  %v308 = vmax.f32 %v259, %v276
  %v309 = vmax.f32 %v260, %v277
  %v310 = vmax.f32 %v261, %v278
  %v311 = vmax.f32 %v262, %v279
  %v312 = vmax.f32 %v263, %v280
  %v313 = vmax.f32 %v264, %v281
  %v314 = vmax.f32 %v265, %v282
  %v315 = vmax.f32 %v266, %v283
  %v316 = vmax.f32 %v267, %v284
  %v317 = vmax.f32 %v268, %v285
  %v318 = vmax.f32 %v269, %v286
  %v319 = vmax.f32 %v270, %v287
  %v320 = vmax.f32 %v271, %v288
  %v321 = vmax.f32 %v272, %v289
  %v322 = vmax.f32 %v273, %v290
  %v323 = vmax.f32 %v274, %v291
  %s324 = scalar_lea.vmem %s0, 896
  %v325 = vld [vmem:[%s324] sm:$0xff]
  %v326 = vld [vmem:[%s324 + $0x8] sm:$0xff]
  %v327 = vld [vmem:[%s324 + $0x10] sm:$0xff]
  %v328 = vld [vmem:[%s324 + $0x18] sm:$0xff]
  %v329 = vld [vmem:[%s324 + $0x20] sm:$0xff]
  %v330 = vld [vmem:[%s324 + $0x28] sm:$0xff]
  %v331 = vld [vmem:[%s324 + $0x30] sm:$0xff]
  %v332 = vld [vmem:[%s324 + $0x38] sm:$0xff]
  %v333 = vld [vmem:[%s324 + $0x40] sm:$0xff]
  %v334 = vld [vmem:[%s324 + $0x48] sm:$0xff]
  %v335 = vld [vmem:[%s324 + $0x50] sm:$0xff]
  %v336 = vld [vmem:[%s324 + $0x58] sm:$0xff]
  %v337 = vld [vmem:[%s324 + $0x60] sm:$0xff]
  %v338 = vld [vmem:[%s324 + $0x68] sm:$0xff]
  %v339 = vld [vmem:[%s324 + $0x70] sm:$0xff]
  %v340 = vld [vmem:[%s324 + $0x78] sm:$0xff]
  %v341 = vadd.f32 %v292, %v325
  %v342 = vadd.f32 %v293, %v326
  %v343 = vadd.f32 %v294, %v327
  %v344 = vadd.f32 %v295, %v328
  %v345 = vadd.f32 %v296, %v329
  %v346 = vadd.f32 %v297, %v330
  %v347 = vadd.f32 %v298, %v331
  %v348 = vadd.f32 %v299, %v332
  %v349 = vadd.f32 %v300, %v333
  %v350 = vadd.f32 %v301, %v334
  %v351 = vadd.f32 %v302, %v335
  %v352 = vadd.f32 %v303, %v336
  %v353 = vadd.f32 %v304, %v337
  %v354 = vadd.f32 %v305, %v338
  %v355 = vadd.f32 %v306, %v339
  %v356 = vadd.f32 %v307, %v340
  %v357 = vmax.f32 %v308, %v325
  %v358 = vmax.f32 %v309, %v326
  %v359 = vmax.f32 %v310, %v327
  %v360 = vmax.f32 %v311, %v328
  %v361 = vmax.f32 %v312, %v329
  %v362 = vmax.f32 %v313, %v330
  %v363 = vmax.f32 %v314, %v331
  %v364 = vmax.f32 %v315, %v332
  %v365 = vmax.f32 %v316, %v333
  %v366 = vmax.f32 %v317, %v334
  %v367 = vmax.f32 %v318, %v335
  %v368 = vmax.f32 %v319, %v336
  %v369 = vmax.f32 %v320, %v337
  %v370 = vmax.f32 %v321, %v338
  %v371 = vmax.f32 %v322, %v339
  %v372 = vmax.f32 %v323, %v340
  %v373 = vadd.f32 %v341, %v342
  %374 = vadd.xlane.f32.xlu0 %v373
  %v375 = vpop.xlane.xlu0 %374
  %v376 = vadd.f32 %v343, %v344
  %377 = vadd.xlane.f32.xlu0 %v376
  %v378 = vpop.xlane.xlu0 %377
  %v379 = vadd.f32 %v345, %v346
  %380 = vadd.xlane.f32.xlu0 %v379
  %v381 = vpop.xlane.xlu0 %380
  %v382 = vadd.f32 %v347, %v348
  %383 = vadd.xlane.f32.xlu0 %v382
  %v384 = vpop.xlane.xlu0 %383
  %v385 = vadd.f32 %v349, %v350
  %386 = vadd.xlane.f32.xlu0 %v385
  %v387 = vpop.xlane.xlu0 %386
  %v388 = vadd.f32 %v351, %v352
  %389 = vadd.xlane.f32.xlu0 %v388
  %v390 = vpop.xlane.xlu0 %389
  %v391 = vadd.f32 %v353, %v354
  %392 = vadd.xlane.f32.xlu0 %v391
  %v393 = vpop.xlane.xlu0 %392
  %v394 = vadd.f32 %v355, %v356
  %395 = vadd.xlane.f32.xlu0 %v394
  %v396 = vpop.xlane.xlu0 %395
  %v397 = vmul.f32 %v375, 0.00048828125
  %v398 = vmul.f32 %v378, 0.00048828125
  %v399 = vmul.f32 %v381, 0.00048828125
  %v400 = vmul.f32 %v384, 0.00048828125
  %v401 = vmul.f32 %v387, 0.00048828125
  %v402 = vmul.f32 %v390, 0.00048828125
  %v403 = vmul.f32 %v393, 0.00048828125
  %v404 = vmul.f32 %v396, 0.00048828125
  %v405 = vmax.f32 %v357, %v358
  %406 = vmax.xlane.f32.xlu0 %v405
  %v407 = vpop.xlane.xlu0 %406
  %v408 = vmax.f32 %v359, %v360
  %409 = vmax.xlane.f32.xlu0 %v408
  %v410 = vpop.xlane.xlu0 %409
  %v411 = vmax.f32 %v361, %v362
  %412 = vmax.xlane.f32.xlu0 %v411
  %v413 = vpop.xlane.xlu0 %412
  %v414 = vmax.f32 %v363, %v364
  %415 = vmax.xlane.f32.xlu0 %v414
  %v416 = vpop.xlane.xlu0 %415
  %v417 = vmax.f32 %v365, %v366
  %418 = vmax.xlane.f32.xlu0 %v417
  %v419 = vpop.xlane.xlu0 %418
  %v420 = vmax.f32 %v367, %v368
  %421 = vmax.xlane.f32.xlu0 %v420
  %v422 = vpop.xlane.xlu0 %421
  %v423 = vmax.f32 %v369, %v370
  %424 = vmax.xlane.f32.xlu0 %v423
  %v425 = vpop.xlane.xlu0 %424
  %v426 = vmax.f32 %v371, %v372
  %427 = vmax.xlane.f32.xlu0 %v426
  %v428 = vpop.xlane.xlu0 %427
  %v437 = vlaneseq
  %v438 = vand.u32 %v437, 127
  %v439 = vlaneseq
  %v440 = vshrl.u32 %v439, 7
  %v441 = vsub.s32 %v438, %v440
  %v442 = vrot.slane %v397, %v441
  %v443 = vadd.s32 %v438, 4294967288
  %v444 = vlaneseq
  %v445 = vshrl.u32 %v444, 7
  %v446 = vsub.s32 %v443, %v445
  %v447 = vrot.slane %v398, %v446
  %vm448 = vcmask 130112
  %v449 = vsel %vm448, %v447, %v442
  %v450 = vadd.s32 %v438, 4294967280
  %v451 = vlaneseq
  %v452 = vshrl.u32 %v451, 7
  %v453 = vsub.s32 %v450, %v452
  %v454 = vrot.slane %v399, %v453
  %vm455 = vcmask 195712
  %v456 = vsel %vm455, %v454, %v449
  %v457 = vadd.s32 %v438, 4294967272
  %v458 = vlaneseq
  %v459 = vshrl.u32 %v458, 7
  %v460 = vsub.s32 %v457, %v459
  %v461 = vrot.slane %v400, %v460
  %vm462 = vcmask 261312
  %v463 = vsel %vm462, %v461, %v456
  %v464 = vlaneseq
  %v465 = vshrl.u32 %v464, 7
  %v466 = vsub.s32 %v438, %v465
  %v467 = vrot.slane %v401, %v466
  %v468 = vlaneseq
  %v469 = vshrl.u32 %v468, 7
  %v470 = vsub.s32 %v443, %v469
  %v471 = vrot.slane %v402, %v470
  %v472 = vsel %vm448, %v471, %v467
  %v473 = vlaneseq
  %v474 = vshrl.u32 %v473, 7
  %v475 = vsub.s32 %v450, %v474
  %v476 = vrot.slane %v403, %v475
  %v477 = vsel %vm455, %v476, %v472
  %v478 = vlaneseq
  %v479 = vshrl.u32 %v478, 7
  %v480 = vsub.s32 %v457, %v479
  %v481 = vrot.slane %v404, %v480
  %v482 = vsel %vm462, %v481, %v477
  %vm483 = vcmask 1041409
  %v484 = vsel %vm483, %v482, %v463
  %v494 = vlaneseq
  %v495 = vshrl.u32 %v494, 7
  %v496 = vsub.s32 %v438, %v495
  %v497 = vrot.slane %v407, %v496
  %v498 = vlaneseq
  %v499 = vshrl.u32 %v498, 7
  %v500 = vsub.s32 %v443, %v499
  %v501 = vrot.slane %v410, %v500
  %v502 = vsel %vm448, %v501, %v497
  %v503 = vlaneseq
  %v504 = vshrl.u32 %v503, 7
  %v505 = vsub.s32 %v450, %v504
  %v506 = vrot.slane %v413, %v505
  %v507 = vsel %vm455, %v506, %v502
  %v508 = vlaneseq
  %v509 = vshrl.u32 %v508, 7
  %v510 = vsub.s32 %v457, %v509
  %v511 = vrot.slane %v416, %v510
  %v512 = vsel %vm462, %v511, %v507
  %v513 = vlaneseq
  %v514 = vshrl.u32 %v513, 7
  %v515 = vsub.s32 %v438, %v514
  %v516 = vrot.slane %v419, %v515
  %v517 = vlaneseq
  %v518 = vshrl.u32 %v517, 7
  %v519 = vsub.s32 %v443, %v518
  %v520 = vrot.slane %v422, %v519
  %v521 = vsel %vm448, %v520, %v516
  %v522 = vlaneseq
  %v523 = vshrl.u32 %v522, 7
  %v524 = vsub.s32 %v450, %v523
  %v525 = vrot.slane %v425, %v524
  %v526 = vsel %vm455, %v525, %v521
  %v527 = vlaneseq
  %v528 = vshrl.u32 %v527, 7
  %v529 = vsub.s32 %v457, %v528
  %v530 = vrot.slane %v428, %v529
  %v531 = vsel %vm462, %v530, %v526
  %vm532 = vcmask 1043459
  %v533 = vsel %vm532, %v531, %v512
  %vm535 = vcmask 1041408
  %v536 = vsel %vm535, %v484, %v533
  %v537 = vld [vmem:[%s1] sm:$0xff]
  %v538 = vld [vmem:[%s1 + $0x8] sm:$0xff]
  %v539 = vld [vmem:[%s1 + $0x10] sm:$0xff]
  %v540 = vld [vmem:[%s1 + $0x18] sm:$0xff]
  %vm541 = vcmask 261120
  %v543 = vsel %vm541, %v536, 0
  %545 = vmatprep.subr.mxu0 0.0
  %546 = vmatpush1.msra.mxu0 %v537
  %547 = vmatprep.subr.mxu0 0.0
  %548 = vmatpush1.msra.mxu0 %v538
  %549 = vmatprep.subr.mxu0 0.0
  %550 = vmatpush1.msra.mxu0 %v539
  %551 = vmatprep.subr.mxu0 0.0
  %552 = vmatpush1.msra.mxu0 %v540
  %553 = vmatprep.subr.mxu0 0.0
  %554 = vmatpush1.msra.mxu0 0.0
  %555 = vmatprep.subr.mxu0 0.0
  %556 = vmatpush1.msra.mxu0 0.0
  %557 = vmatprep.subr.mxu0 0.0
  %558 = vmatpush1.msra.mxu0 0.0
  %559 = vmatprep.subr.mxu0 0.0
  %560 = vmatpush1.msra.mxu0 0.0
  %561 = vmatprep.subr.mxu0 0.0
  %562 = vmatpush1.msra.mxu0 0.0
  %563 = vmatprep.subr.mxu0 0.0
  %564 = vmatpush1.msra.mxu0 0.0
  %565 = vmatprep.subr.mxu0 0.0
  %566 = vmatpush1.msra.mxu0 0.0
  %567 = vmatprep.subr.mxu0 0.0
  %568 = vmatpush1.msra.mxu0 0.0
  %569 = vmatprep.subr.mxu0 0.0
  %570 = vmatpush1.msra.mxu0 0.0
  %571 = vmatprep.subr.mxu0 0.0
  %572 = vmatpush1.msra.mxu0 0.0
  %573 = vmatprep.subr.mxu0 0.0
  %574 = vmatpush1.msra.mxu0 0.0
  %575 = vmatprep.subr.mxu0 0.0
  %576 = vmatpush1.msra.mxu0 0.0
  %577 = vmatprep.subr.mxu0 0.0
  %578 = vmatpush1.msra.mxu0 0.0
  %579 = vmatprep.subr.mxu0 0.0
  %580 = vmatpush1.msra.mxu0 0.0
  %581 = vmatprep.subr.mxu0 0.0
  %582 = vmatpush1.msra.mxu0 0.0
  %583 = vmatprep.subr.mxu0 0.0
  %584 = vmatpush1.msra.mxu0 0.0
  %585 = vmatprep.subr.mxu0 0.0
  %586 = vmatpush1.msra.mxu0 0.0
  %587 = vmatprep.subr.mxu0 0.0
  %588 = vmatpush1.msra.mxu0 0.0
  %589 = vmatprep.subr.mxu0 0.0
  %590 = vmatpush1.msra.mxu0 0.0
  %591 = vmatprep.subr.mxu0 0.0
  %592 = vmatpush1.msra.mxu0 0.0
  %593 = vmatprep.subr.mxu0 0.0
  %594 = vmatpush1.msra.mxu0 0.0
  %595 = vmatprep.subr.mxu0 0.0
  %596 = vmatpush1.msra.mxu0 0.0
  %597 = vmatprep.subr.mxu0 0.0
  %598 = vmatpush1.msra.mxu0 0.0
  %599 = vmatprep.subr.mxu0 0.0
  %600 = vmatpush1.msra.mxu0 0.0
  %601 = vmatprep.subr.mxu0 0.0
  %602 = vmatpush1.msra.mxu0 0.0
  %603 = vmatprep.subr.mxu0 0.0
  %604 = vmatpush1.msra.mxu0 0.0
  %605 = vmatprep.subr.mxu0 0.0
  %606 = vmatpush1.msra.mxu0 0.0
  %607 = vmatprep.subr.mxu0 0.0
  %608 = vmatpush1.msra.mxu0 0.0
  %609 = vmatprep.mubr.f32.mxu0 0.0
  %610 = vmatmul.mubr.f32.gmra.mrb[0].mxu0 %v543
  %v611 = vpop.f32.mrb[0].mxu0
  %v612 = vadd.f32 0.0, %v611
  %v613 = vpop.f32.mrb[0].mxu0
  %614 = vdwg.mxu0
  %v615 = vmax.f32 %v612, 0.0
  %v616 = vld [vmem:[%s2] sm:$0x3]
  %vm617 = vcmask 15360
  %v619 = vsel %vm617, %v615, 0
  %v622 = vsel %vm535, %v616, 0
  %624 = vmatprep.subr.mxu0 0.0
  %625 = vmatpush1.msra.mxu0 %v622
  %626 = vmatprep.subr.mxu0 0.0
  %627 = vmatpush1.msra.mxu0 0.0
  %628 = vmatprep.subr.mxu0 0.0
  %629 = vmatpush1.msra.mxu0 0.0
  %630 = vmatprep.subr.mxu0 0.0
  %631 = vmatpush1.msra.mxu0 0.0
  %632 = vmatprep.subr.mxu0 0.0
  %633 = vmatpush1.msra.mxu0 0.0
  %634 = vmatprep.subr.mxu0 0.0
  %635 = vmatpush1.msra.mxu0 0.0
  %636 = vmatprep.subr.mxu0 0.0
  %637 = vmatpush1.msra.mxu0 0.0
  %638 = vmatprep.subr.mxu0 0.0
  %639 = vmatpush1.msra.mxu0 0.0
  %640 = vmatprep.subr.mxu0 0.0
  %641 = vmatpush1.msra.mxu0 0.0
  %642 = vmatprep.subr.mxu0 0.0
  %643 = vmatpush1.msra.mxu0 0.0
  %644 = vmatprep.subr.mxu0 0.0
  %645 = vmatpush1.msra.mxu0 0.0
  %646 = vmatprep.subr.mxu0 0.0
  %647 = vmatpush1.msra.mxu0 0.0
  %648 = vmatprep.subr.mxu0 0.0
  %649 = vmatpush1.msra.mxu0 0.0
  %650 = vmatprep.subr.mxu0 0.0
  %651 = vmatpush1.msra.mxu0 0.0
  %652 = vmatprep.subr.mxu0 0.0
  %653 = vmatpush1.msra.mxu0 0.0
  %654 = vmatprep.subr.mxu0 0.0
  %655 = vmatpush1.msra.mxu0 0.0
  %656 = vmatprep.subr.mxu0 0.0
  %657 = vmatpush1.msra.mxu0 0.0
  %658 = vmatprep.subr.mxu0 0.0
  %659 = vmatpush1.msra.mxu0 0.0
  %660 = vmatprep.subr.mxu0 0.0
  %661 = vmatpush1.msra.mxu0 0.0
  %662 = vmatprep.subr.mxu0 0.0
  %663 = vmatpush1.msra.mxu0 0.0
  %664 = vmatprep.subr.mxu0 0.0
  %665 = vmatpush1.msra.mxu0 0.0
  %666 = vmatprep.subr.mxu0 0.0
  %667 = vmatpush1.msra.mxu0 0.0
  %668 = vmatprep.subr.mxu0 0.0
  %669 = vmatpush1.msra.mxu0 0.0
  %670 = vmatprep.subr.mxu0 0.0
  %671 = vmatpush1.msra.mxu0 0.0
  %672 = vmatprep.subr.mxu0 0.0
  %673 = vmatpush1.msra.mxu0 0.0
  %674 = vmatprep.subr.mxu0 0.0
  %675 = vmatpush1.msra.mxu0 0.0
  %676 = vmatprep.subr.mxu0 0.0
  %677 = vmatpush1.msra.mxu0 0.0
  %678 = vmatprep.subr.mxu0 0.0
  %679 = vmatpush1.msra.mxu0 0.0
  %680 = vmatprep.subr.mxu0 0.0
  %681 = vmatpush1.msra.mxu0 0.0
  %682 = vmatprep.subr.mxu0 0.0
  %683 = vmatpush1.msra.mxu0 0.0
  %684 = vmatprep.subr.mxu0 0.0
  %685 = vmatpush1.msra.mxu0 0.0
  %686 = vmatprep.subr.mxu0 0.0
  %687 = vmatpush1.msra.mxu0 0.0
  %688 = vmatprep.mubr.f32.mxu0 0.0
  %689 = vmatmul.mubr.f32.gmra.mrb[0].mxu0 %v619
  %v690 = vpop.f32.mrb[0].mxu0
  %v691 = vadd.f32 0.0, %v690
  %v692 = vpop.f32.mrb[0].mxu0
  %693 = vdwg.mxu0
  %v695 = vrot.slane %v691, 2
  %v697 = vadd.f32 %v691, %v695
  %v698 = vsub.f32 0.0, %v697
  %v699 = vmul.f32 %v698, 1.442695
  %v700 = vpow.pop %v699
  %v701 = vadd.f32 %v700, 1.0
  %v702 = vrcp.pop %v701
  %v703 = vlaneseq
  %v704 = vshrl.u32 %v703, 7
  %v705 = vsub.s32 0, %v704
  %v706 = vrot.slane %v702, %v705
  %708 = vbcast.lane.b32.xlu0 %v706, 256
  %v709 = vpop.permute.xlu0 %708
  %s711 = sor.u32 256, 8
  %712 = vbcast.lane.b32.xlu0 %v706, %s711
  %v713 = vpop.permute.xlu0 %712
  %s715 = sor.u32 256, 16
  %716 = vbcast.lane.b32.xlu0 %v706, %s715
  %v717 = vpop.permute.xlu0 %716
  %s719 = sor.u32 256, 24
  %720 = vbcast.lane.b32.xlu0 %v706, %s719
  %v721 = vpop.permute.xlu0 %720
  %v722 = vlaneseq
  %v723 = vshrl.u32 %v722, 7
  %v724 = vsub.s32 1, %v723
  %v725 = vrot.slane %v702, %v724
  %727 = vbcast.lane.b32.xlu0 %v725, 256
  %v728 = vpop.permute.xlu0 %727
  %s730 = sor.u32 256, 8
  %731 = vbcast.lane.b32.xlu0 %v725, %s730
  %v732 = vpop.permute.xlu0 %731
  %s734 = sor.u32 256, 16
  %735 = vbcast.lane.b32.xlu0 %v725, %s734
  %v736 = vpop.permute.xlu0 %735
  %s738 = sor.u32 256, 24
  %739 = vbcast.lane.b32.xlu0 %v725, %s738
  %v740 = vpop.permute.xlu0 %739
  %v741 = vmul.f32 %v709, %v14
  %v742 = vmul.f32 %v709, %v15
  %v743 = vmul.f32 %v713, %v16
  %v744 = vmul.f32 %v713, %v17
  %v745 = vmul.f32 %v717, %v18
  %v746 = vmul.f32 %v717, %v19
  %v747 = vmul.f32 %v721, %v20
  %v748 = vmul.f32 %v721, %v21
  %v749 = vmul.f32 %v728, %v22
  %v750 = vmul.f32 %v728, %v23
  %v751 = vmul.f32 %v732, %v24
  %v752 = vmul.f32 %v732, %v25
  %v753 = vmul.f32 %v736, %v26
  %v754 = vmul.f32 %v736, %v27
  %v755 = vmul.f32 %v740, %v28
  %v756 = vmul.f32 %v740, %v29
  %v757 = vmax.f32 %v741, 0.0
  %v758 = vmax.f32 %v742, 0.0
  %v759 = vmax.f32 %v743, 0.0
  %v760 = vmax.f32 %v744, 0.0
  %v761 = vmax.f32 %v745, 0.0
  %v762 = vmax.f32 %v746, 0.0
  %v763 = vmax.f32 %v747, 0.0
  %v764 = vmax.f32 %v748, 0.0
  %v765 = vmax.f32 %v749, 0.0
  %v766 = vmax.f32 %v750, 0.0
  %v767 = vmax.f32 %v751, 0.0
  %v768 = vmax.f32 %v752, 0.0
  %v769 = vmax.f32 %v753, 0.0
  %v770 = vmax.f32 %v754, 0.0
  %v771 = vmax.f32 %v755, 0.0
  %v772 = vmax.f32 %v756, 0.0
  %773 = vst [vmem:[%s3] sm:$0xff] %v757
  %774 = vst [vmem:[%s3 + $0x8] sm:$0xff] %v758
  %775 = vst [vmem:[%s3 + $0x10] sm:$0xff] %v759
  %776 = vst [vmem:[%s3 + $0x18] sm:$0xff] %v760
  %777 = vst [vmem:[%s3 + $0x20] sm:$0xff] %v761
  %778 = vst [vmem:[%s3 + $0x28] sm:$0xff] %v762
  %779 = vst [vmem:[%s3 + $0x30] sm:$0xff] %v763
  %780 = vst [vmem:[%s3 + $0x38] sm:$0xff] %v764
  %781 = vst [vmem:[%s3 + $0x40] sm:$0xff] %v765
  %782 = vst [vmem:[%s3 + $0x48] sm:$0xff] %v766
  %783 = vst [vmem:[%s3 + $0x50] sm:$0xff] %v767
  %784 = vst [vmem:[%s3 + $0x58] sm:$0xff] %v768
  %785 = vst [vmem:[%s3 + $0x60] sm:$0xff] %v769
  %786 = vst [vmem:[%s3 + $0x68] sm:$0xff] %v770
  %787 = vst [vmem:[%s3 + $0x70] sm:$0xff] %v771
  %788 = vst [vmem:[%s3 + $0x78] sm:$0xff] %v772
  %v789 = vld [vmem:[%s30] sm:$0xff]
  %v790 = vld [vmem:[%s30 + $0x8] sm:$0xff]
  %v791 = vld [vmem:[%s30 + $0x10] sm:$0xff]
  %v792 = vld [vmem:[%s30 + $0x18] sm:$0xff]
  %v793 = vld [vmem:[%s30 + $0x20] sm:$0xff]
  %v794 = vld [vmem:[%s30 + $0x28] sm:$0xff]
  %v795 = vld [vmem:[%s30 + $0x30] sm:$0xff]
  %v796 = vld [vmem:[%s30 + $0x38] sm:$0xff]
  %v797 = vld [vmem:[%s30 + $0x40] sm:$0xff]
  %v798 = vld [vmem:[%s30 + $0x48] sm:$0xff]
  %v799 = vld [vmem:[%s30 + $0x50] sm:$0xff]
  %v800 = vld [vmem:[%s30 + $0x58] sm:$0xff]
  %v801 = vld [vmem:[%s30 + $0x60] sm:$0xff]
  %v802 = vld [vmem:[%s30 + $0x68] sm:$0xff]
  %v803 = vld [vmem:[%s30 + $0x70] sm:$0xff]
  %v804 = vld [vmem:[%s30 + $0x78] sm:$0xff]
  %v805 = vmul.f32 %v709, %v789
  %v806 = vmul.f32 %v709, %v790
  %v807 = vmul.f32 %v713, %v791
  %v808 = vmul.f32 %v713, %v792
  %v809 = vmul.f32 %v717, %v793
  %v810 = vmul.f32 %v717, %v794
  %v811 = vmul.f32 %v721, %v795
  %v812 = vmul.f32 %v721, %v796
  %v813 = vmul.f32 %v728, %v797
  %v814 = vmul.f32 %v728, %v798
  %v815 = vmul.f32 %v732, %v799
  %v816 = vmul.f32 %v732, %v800
  %v817 = vmul.f32 %v736, %v801
  %v818 = vmul.f32 %v736, %v802
  %v819 = vmul.f32 %v740, %v803
  %v820 = vmul.f32 %v740, %v804
  %v821 = vmax.f32 %v805, 0.0
  %v822 = vmax.f32 %v806, 0.0
  %v823 = vmax.f32 %v807, 0.0
  %v824 = vmax.f32 %v808, 0.0
  %v825 = vmax.f32 %v809, 0.0
  %v826 = vmax.f32 %v810, 0.0
  %v827 = vmax.f32 %v811, 0.0
  %v828 = vmax.f32 %v812, 0.0
  %v829 = vmax.f32 %v813, 0.0
  %v830 = vmax.f32 %v814, 0.0
  %v831 = vmax.f32 %v815, 0.0
  %v832 = vmax.f32 %v816, 0.0
  %v833 = vmax.f32 %v817, 0.0
  %v834 = vmax.f32 %v818, 0.0
  %v835 = vmax.f32 %v819, 0.0
  %v836 = vmax.f32 %v820, 0.0
  %s837 = scalar_lea.vmem %s3, 128
  %838 = vst [vmem:[%s837] sm:$0xff] %v821
  %839 = vst [vmem:[%s837 + $0x8] sm:$0xff] %v822
  %840 = vst [vmem:[%s837 + $0x10] sm:$0xff] %v823
  %841 = vst [vmem:[%s837 + $0x18] sm:$0xff] %v824
  %842 = vst [vmem:[%s837 + $0x20] sm:$0xff] %v825
  %843 = vst [vmem:[%s837 + $0x28] sm:$0xff] %v826
  %844 = vst [vmem:[%s837 + $0x30] sm:$0xff] %v827
  %845 = vst [vmem:[%s837 + $0x38] sm:$0xff] %v828
  %846 = vst [vmem:[%s837 + $0x40] sm:$0xff] %v829
  %847 = vst [vmem:[%s837 + $0x48] sm:$0xff] %v830
  %848 = vst [vmem:[%s837 + $0x50] sm:$0xff] %v831
  %849 = vst [vmem:[%s837 + $0x58] sm:$0xff] %v832
  %850 = vst [vmem:[%s837 + $0x60] sm:$0xff] %v833
  %851 = vst [vmem:[%s837 + $0x68] sm:$0xff] %v834
  %852 = vst [vmem:[%s837 + $0x70] sm:$0xff] %v835
  %853 = vst [vmem:[%s837 + $0x78] sm:$0xff] %v836
  %v854 = vld [vmem:[%s79] sm:$0xff]
  %v855 = vld [vmem:[%s79 + $0x8] sm:$0xff]
  %v856 = vld [vmem:[%s79 + $0x10] sm:$0xff]
  %v857 = vld [vmem:[%s79 + $0x18] sm:$0xff]
  %v858 = vld [vmem:[%s79 + $0x20] sm:$0xff]
  %v859 = vld [vmem:[%s79 + $0x28] sm:$0xff]
  %v860 = vld [vmem:[%s79 + $0x30] sm:$0xff]
  %v861 = vld [vmem:[%s79 + $0x38] sm:$0xff]
  %v862 = vld [vmem:[%s79 + $0x40] sm:$0xff]
  %v863 = vld [vmem:[%s79 + $0x48] sm:$0xff]
  %v864 = vld [vmem:[%s79 + $0x50] sm:$0xff]
  %v865 = vld [vmem:[%s79 + $0x58] sm:$0xff]
  %v866 = vld [vmem:[%s79 + $0x60] sm:$0xff]
  %v867 = vld [vmem:[%s79 + $0x68] sm:$0xff]
  %v868 = vld [vmem:[%s79 + $0x70] sm:$0xff]
  %v869 = vld [vmem:[%s79 + $0x78] sm:$0xff]
  %v870 = vmul.f32 %v709, %v854
  %v871 = vmul.f32 %v709, %v855
  %v872 = vmul.f32 %v713, %v856
  %v873 = vmul.f32 %v713, %v857
  %v874 = vmul.f32 %v717, %v858
  %v875 = vmul.f32 %v717, %v859
  %v876 = vmul.f32 %v721, %v860
  %v877 = vmul.f32 %v721, %v861
  %v878 = vmul.f32 %v728, %v862
  %v879 = vmul.f32 %v728, %v863
  %v880 = vmul.f32 %v732, %v864
  %v881 = vmul.f32 %v732, %v865
  %v882 = vmul.f32 %v736, %v866
  %v883 = vmul.f32 %v736, %v867
  %v884 = vmul.f32 %v740, %v868
  %v885 = vmul.f32 %v740, %v869
  %v886 = vmax.f32 %v870, 0.0
  %v887 = vmax.f32 %v871, 0.0
  %v888 = vmax.f32 %v872, 0.0
  %v889 = vmax.f32 %v873, 0.0
  %v890 = vmax.f32 %v874, 0.0
  %v891 = vmax.f32 %v875, 0.0
  %v892 = vmax.f32 %v876, 0.0
  %v893 = vmax.f32 %v877, 0.0
  %v894 = vmax.f32 %v878, 0.0
  %v895 = vmax.f32 %v879, 0.0
  %v896 = vmax.f32 %v880, 0.0
  %v897 = vmax.f32 %v881, 0.0
  %v898 = vmax.f32 %v882, 0.0
  %v899 = vmax.f32 %v883, 0.0
  %v900 = vmax.f32 %v884, 0.0
  %v901 = vmax.f32 %v885, 0.0
  %s902 = scalar_lea.vmem %s3, 256
  %903 = vst [vmem:[%s902] sm:$0xff] %v886
  %904 = vst [vmem:[%s902 + $0x8] sm:$0xff] %v887
  %905 = vst [vmem:[%s902 + $0x10] sm:$0xff] %v888
  %906 = vst [vmem:[%s902 + $0x18] sm:$0xff] %v889
  %907 = vst [vmem:[%s902 + $0x20] sm:$0xff] %v890
  %908 = vst [vmem:[%s902 + $0x28] sm:$0xff] %v891
  %909 = vst [vmem:[%s902 + $0x30] sm:$0xff] %v892
  %910 = vst [vmem:[%s902 + $0x38] sm:$0xff] %v893
  %911 = vst [vmem:[%s902 + $0x40] sm:$0xff] %v894
  %912 = vst [vmem:[%s902 + $0x48] sm:$0xff] %v895
  %913 = vst [vmem:[%s902 + $0x50] sm:$0xff] %v896
  %914 = vst [vmem:[%s902 + $0x58] sm:$0xff] %v897
  %915 = vst [vmem:[%s902 + $0x60] sm:$0xff] %v898
  %916 = vst [vmem:[%s902 + $0x68] sm:$0xff] %v899
  %917 = vst [vmem:[%s902 + $0x70] sm:$0xff] %v900
  %918 = vst [vmem:[%s902 + $0x78] sm:$0xff] %v901
  %v919 = vld [vmem:[%s128] sm:$0xff]
  %v920 = vld [vmem:[%s128 + $0x8] sm:$0xff]
  %v921 = vld [vmem:[%s128 + $0x10] sm:$0xff]
  %v922 = vld [vmem:[%s128 + $0x18] sm:$0xff]
  %v923 = vld [vmem:[%s128 + $0x20] sm:$0xff]
  %v924 = vld [vmem:[%s128 + $0x28] sm:$0xff]
  %v925 = vld [vmem:[%s128 + $0x30] sm:$0xff]
  %v926 = vld [vmem:[%s128 + $0x38] sm:$0xff]
  %v927 = vld [vmem:[%s128 + $0x40] sm:$0xff]
  %v928 = vld [vmem:[%s128 + $0x48] sm:$0xff]
  %v929 = vld [vmem:[%s128 + $0x50] sm:$0xff]
  %v930 = vld [vmem:[%s128 + $0x58] sm:$0xff]
  %v931 = vld [vmem:[%s128 + $0x60] sm:$0xff]
  %v932 = vld [vmem:[%s128 + $0x68] sm:$0xff]
  %v933 = vld [vmem:[%s128 + $0x70] sm:$0xff]
  %v934 = vld [vmem:[%s128 + $0x78] sm:$0xff]
  %v935 = vmul.f32 %v709, %v919
  %v936 = vmul.f32 %v709, %v920
  %v937 = vmul.f32 %v713, %v921
  %v938 = vmul.f32 %v713, %v922
  %v939 = vmul.f32 %v717, %v923
  %v940 = vmul.f32 %v717, %v924
  %v941 = vmul.f32 %v721, %v925
  %v942 = vmul.f32 %v721, %v926
  %v943 = vmul.f32 %v728, %v927
  %v944 = vmul.f32 %v728, %v928
  %v945 = vmul.f32 %v732, %v929
  %v946 = vmul.f32 %v732, %v930
  %v947 = vmul.f32 %v736, %v931
  %v948 = vmul.f32 %v736, %v932
  %v949 = vmul.f32 %v740, %v933
  %v950 = vmul.f32 %v740, %v934
  %v951 = vmax.f32 %v935, 0.0
  %v952 = vmax.f32 %v936, 0.0
  %v953 = vmax.f32 %v937, 0.0
  %v954 = vmax.f32 %v938, 0.0
  %v955 = vmax.f32 %v939, 0.0
  %v956 = vmax.f32 %v940, 0.0
  %v957 = vmax.f32 %v941, 0.0
  %v958 = vmax.f32 %v942, 0.0
  %v959 = vmax.f32 %v943, 0.0
  %v960 = vmax.f32 %v944, 0.0
  %v961 = vmax.f32 %v945, 0.0
  %v962 = vmax.f32 %v946, 0.0
  %v963 = vmax.f32 %v947, 0.0
  %v964 = vmax.f32 %v948, 0.0
  %v965 = vmax.f32 %v949, 0.0
  %v966 = vmax.f32 %v950, 0.0
  %s967 = scalar_lea.vmem %s3, 384
  %968 = vst [vmem:[%s967] sm:$0xff] %v951
  %969 = vst [vmem:[%s967 + $0x8] sm:$0xff] %v952
  %970 = vst [vmem:[%s967 + $0x10] sm:$0xff] %v953
  %971 = vst [vmem:[%s967 + $0x18] sm:$0xff] %v954
  %972 = vst [vmem:[%s967 + $0x20] sm:$0xff] %v955
  %973 = vst [vmem:[%s967 + $0x28] sm:$0xff] %v956
  %974 = vst [vmem:[%s967 + $0x30] sm:$0xff] %v957
  %975 = vst [vmem:[%s967 + $0x38] sm:$0xff] %v958
  %976 = vst [vmem:[%s967 + $0x40] sm:$0xff] %v959
  %977 = vst [vmem:[%s967 + $0x48] sm:$0xff] %v960
  %978 = vst [vmem:[%s967 + $0x50] sm:$0xff] %v961
  %979 = vst [vmem:[%s967 + $0x58] sm:$0xff] %v962
  %980 = vst [vmem:[%s967 + $0x60] sm:$0xff] %v963
  %981 = vst [vmem:[%s967 + $0x68] sm:$0xff] %v964
  %982 = vst [vmem:[%s967 + $0x70] sm:$0xff] %v965
  %983 = vst [vmem:[%s967 + $0x78] sm:$0xff] %v966
  %v984 = vld [vmem:[%s177] sm:$0xff]
  %v985 = vld [vmem:[%s177 + $0x8] sm:$0xff]
  %v986 = vld [vmem:[%s177 + $0x10] sm:$0xff]
  %v987 = vld [vmem:[%s177 + $0x18] sm:$0xff]
  %v988 = vld [vmem:[%s177 + $0x20] sm:$0xff]
  %v989 = vld [vmem:[%s177 + $0x28] sm:$0xff]
  %v990 = vld [vmem:[%s177 + $0x30] sm:$0xff]
  %v991 = vld [vmem:[%s177 + $0x38] sm:$0xff]
  %v992 = vld [vmem:[%s177 + $0x40] sm:$0xff]
  %v993 = vld [vmem:[%s177 + $0x48] sm:$0xff]
  %v994 = vld [vmem:[%s177 + $0x50] sm:$0xff]
  %v995 = vld [vmem:[%s177 + $0x58] sm:$0xff]
  %v996 = vld [vmem:[%s177 + $0x60] sm:$0xff]
  %v997 = vld [vmem:[%s177 + $0x68] sm:$0xff]
  %v998 = vld [vmem:[%s177 + $0x70] sm:$0xff]
  %v999 = vld [vmem:[%s177 + $0x78] sm:$0xff]
  %v1000 = vmul.f32 %v709, %v984
  %v1001 = vmul.f32 %v709, %v985
  %v1002 = vmul.f32 %v713, %v986
  %v1003 = vmul.f32 %v713, %v987
  %v1004 = vmul.f32 %v717, %v988
  %v1005 = vmul.f32 %v717, %v989
  %v1006 = vmul.f32 %v721, %v990
  %v1007 = vmul.f32 %v721, %v991
  %v1008 = vmul.f32 %v728, %v992
  %v1009 = vmul.f32 %v728, %v993
  %v1010 = vmul.f32 %v732, %v994
  %v1011 = vmul.f32 %v732, %v995
  %v1012 = vmul.f32 %v736, %v996
  %v1013 = vmul.f32 %v736, %v997
  %v1014 = vmul.f32 %v740, %v998
  %v1015 = vmul.f32 %v740, %v999
  %v1016 = vmax.f32 %v1000, 0.0
  %v1017 = vmax.f32 %v1001, 0.0
  %v1018 = vmax.f32 %v1002, 0.0
  %v1019 = vmax.f32 %v1003, 0.0
  %v1020 = vmax.f32 %v1004, 0.0
  %v1021 = vmax.f32 %v1005, 0.0
  %v1022 = vmax.f32 %v1006, 0.0
  %v1023 = vmax.f32 %v1007, 0.0
  %v1024 = vmax.f32 %v1008, 0.0
  %v1025 = vmax.f32 %v1009, 0.0
  %v1026 = vmax.f32 %v1010, 0.0
  %v1027 = vmax.f32 %v1011, 0.0
  %v1028 = vmax.f32 %v1012, 0.0
  %v1029 = vmax.f32 %v1013, 0.0
  %v1030 = vmax.f32 %v1014, 0.0
  %v1031 = vmax.f32 %v1015, 0.0
  %s1032 = scalar_lea.vmem %s3, 512
  %1033 = vst [vmem:[%s1032] sm:$0xff] %v1016
  %1034 = vst [vmem:[%s1032 + $0x8] sm:$0xff] %v1017
  %1035 = vst [vmem:[%s1032 + $0x10] sm:$0xff] %v1018
  %1036 = vst [vmem:[%s1032 + $0x18] sm:$0xff] %v1019
  %1037 = vst [vmem:[%s1032 + $0x20] sm:$0xff] %v1020
  %1038 = vst [vmem:[%s1032 + $0x28] sm:$0xff] %v1021
  %1039 = vst [vmem:[%s1032 + $0x30] sm:$0xff] %v1022
  %1040 = vst [vmem:[%s1032 + $0x38] sm:$0xff] %v1023
  %1041 = vst [vmem:[%s1032 + $0x40] sm:$0xff] %v1024
  %1042 = vst [vmem:[%s1032 + $0x48] sm:$0xff] %v1025
  %1043 = vst [vmem:[%s1032 + $0x50] sm:$0xff] %v1026
  %1044 = vst [vmem:[%s1032 + $0x58] sm:$0xff] %v1027
  %1045 = vst [vmem:[%s1032 + $0x60] sm:$0xff] %v1028
  %1046 = vst [vmem:[%s1032 + $0x68] sm:$0xff] %v1029
  %1047 = vst [vmem:[%s1032 + $0x70] sm:$0xff] %v1030
  %1048 = vst [vmem:[%s1032 + $0x78] sm:$0xff] %v1031
  %v1049 = vld [vmem:[%s226] sm:$0xff]
  %v1050 = vld [vmem:[%s226 + $0x8] sm:$0xff]
  %v1051 = vld [vmem:[%s226 + $0x10] sm:$0xff]
  %v1052 = vld [vmem:[%s226 + $0x18] sm:$0xff]
  %v1053 = vld [vmem:[%s226 + $0x20] sm:$0xff]
  %v1054 = vld [vmem:[%s226 + $0x28] sm:$0xff]
  %v1055 = vld [vmem:[%s226 + $0x30] sm:$0xff]
  %v1056 = vld [vmem:[%s226 + $0x38] sm:$0xff]
  %v1057 = vld [vmem:[%s226 + $0x40] sm:$0xff]
  %v1058 = vld [vmem:[%s226 + $0x48] sm:$0xff]
  %v1059 = vld [vmem:[%s226 + $0x50] sm:$0xff]
  %v1060 = vld [vmem:[%s226 + $0x58] sm:$0xff]
  %v1061 = vld [vmem:[%s226 + $0x60] sm:$0xff]
  %v1062 = vld [vmem:[%s226 + $0x68] sm:$0xff]
  %v1063 = vld [vmem:[%s226 + $0x70] sm:$0xff]
  %v1064 = vld [vmem:[%s226 + $0x78] sm:$0xff]
  %v1065 = vmul.f32 %v709, %v1049
  %v1066 = vmul.f32 %v709, %v1050
  %v1067 = vmul.f32 %v713, %v1051
  %v1068 = vmul.f32 %v713, %v1052
  %v1069 = vmul.f32 %v717, %v1053
  %v1070 = vmul.f32 %v717, %v1054
  %v1071 = vmul.f32 %v721, %v1055
  %v1072 = vmul.f32 %v721, %v1056
  %v1073 = vmul.f32 %v728, %v1057
  %v1074 = vmul.f32 %v728, %v1058
  %v1075 = vmul.f32 %v732, %v1059
  %v1076 = vmul.f32 %v732, %v1060
  %v1077 = vmul.f32 %v736, %v1061
  %v1078 = vmul.f32 %v736, %v1062
  %v1079 = vmul.f32 %v740, %v1063
  %v1080 = vmul.f32 %v740, %v1064
  %v1081 = vmax.f32 %v1065, 0.0
  %v1082 = vmax.f32 %v1066, 0.0
  %v1083 = vmax.f32 %v1067, 0.0
  %v1084 = vmax.f32 %v1068, 0.0
  %v1085 = vmax.f32 %v1069, 0.0
  %v1086 = vmax.f32 %v1070, 0.0
  %v1087 = vmax.f32 %v1071, 0.0
  %v1088 = vmax.f32 %v1072, 0.0
  %v1089 = vmax.f32 %v1073, 0.0
  %v1090 = vmax.f32 %v1074, 0.0
  %v1091 = vmax.f32 %v1075, 0.0
  %v1092 = vmax.f32 %v1076, 0.0
  %v1093 = vmax.f32 %v1077, 0.0
  %v1094 = vmax.f32 %v1078, 0.0
  %v1095 = vmax.f32 %v1079, 0.0
  %v1096 = vmax.f32 %v1080, 0.0
  %s1097 = scalar_lea.vmem %s3, 640
  %1098 = vst [vmem:[%s1097] sm:$0xff] %v1081
  %1099 = vst [vmem:[%s1097 + $0x8] sm:$0xff] %v1082
  %1100 = vst [vmem:[%s1097 + $0x10] sm:$0xff] %v1083
  %1101 = vst [vmem:[%s1097 + $0x18] sm:$0xff] %v1084
  %1102 = vst [vmem:[%s1097 + $0x20] sm:$0xff] %v1085
  %1103 = vst [vmem:[%s1097 + $0x28] sm:$0xff] %v1086
  %1104 = vst [vmem:[%s1097 + $0x30] sm:$0xff] %v1087
  %1105 = vst [vmem:[%s1097 + $0x38] sm:$0xff] %v1088
  %1106 = vst [vmem:[%s1097 + $0x40] sm:$0xff] %v1089
  %1107 = vst [vmem:[%s1097 + $0x48] sm:$0xff] %v1090
  %1108 = vst [vmem:[%s1097 + $0x50] sm:$0xff] %v1091
  %1109 = vst [vmem:[%s1097 + $0x58] sm:$0xff] %v1092
  %1110 = vst [vmem:[%s1097 + $0x60] sm:$0xff] %v1093
  %1111 = vst [vmem:[%s1097 + $0x68] sm:$0xff] %v1094
  %1112 = vst [vmem:[%s1097 + $0x70] sm:$0xff] %v1095
  %1113 = vst [vmem:[%s1097 + $0x78] sm:$0xff] %v1096
  %v1114 = vld [vmem:[%s275] sm:$0xff]
  %v1115 = vld [vmem:[%s275 + $0x8] sm:$0xff]
  %v1116 = vld [vmem:[%s275 + $0x10] sm:$0xff]
  %v1117 = vld [vmem:[%s275 + $0x18] sm:$0xff]
  %v1118 = vld [vmem:[%s275 + $0x20] sm:$0xff]
  %v1119 = vld [vmem:[%s275 + $0x28] sm:$0xff]
  %v1120 = vld [vmem:[%s275 + $0x30] sm:$0xff]
  %v1121 = vld [vmem:[%s275 + $0x38] sm:$0xff]
  %v1122 = vld [vmem:[%s275 + $0x40] sm:$0xff]
  %v1123 = vld [vmem:[%s275 + $0x48] sm:$0xff]
  %v1124 = vld [vmem:[%s275 + $0x50] sm:$0xff]
  %v1125 = vld [vmem:[%s275 + $0x58] sm:$0xff]
  %v1126 = vld [vmem:[%s275 + $0x60] sm:$0xff]
  %v1127 = vld [vmem:[%s275 + $0x68] sm:$0xff]
  %v1128 = vld [vmem:[%s275 + $0x70] sm:$0xff]
  %v1129 = vld [vmem:[%s275 + $0x78] sm:$0xff]
  %v1130 = vmul.f32 %v709, %v1114
  %v1131 = vmul.f32 %v709, %v1115
  %v1132 = vmul.f32 %v713, %v1116
  %v1133 = vmul.f32 %v713, %v1117
  %v1134 = vmul.f32 %v717, %v1118
  %v1135 = vmul.f32 %v717, %v1119
  %v1136 = vmul.f32 %v721, %v1120
  %v1137 = vmul.f32 %v721, %v1121
  %v1138 = vmul.f32 %v728, %v1122
  %v1139 = vmul.f32 %v728, %v1123
  %v1140 = vmul.f32 %v732, %v1124
  %v1141 = vmul.f32 %v732, %v1125
  %v1142 = vmul.f32 %v736, %v1126
  %v1143 = vmul.f32 %v736, %v1127
  %v1144 = vmul.f32 %v740, %v1128
  %v1145 = vmul.f32 %v740, %v1129
  %v1146 = vmax.f32 %v1130, 0.0
  %v1147 = vmax.f32 %v1131, 0.0
  %v1148 = vmax.f32 %v1132, 0.0
  %v1149 = vmax.f32 %v1133, 0.0
  %v1150 = vmax.f32 %v1134, 0.0
  %v1151 = vmax.f32 %v1135, 0.0
  %v1152 = vmax.f32 %v1136, 0.0
  %v1153 = vmax.f32 %v1137, 0.0
  %v1154 = vmax.f32 %v1138, 0.0
  %v1155 = vmax.f32 %v1139, 0.0
  %v1156 = vmax.f32 %v1140, 0.0
  %v1157 = vmax.f32 %v1141, 0.0
  %v1158 = vmax.f32 %v1142, 0.0
  %v1159 = vmax.f32 %v1143, 0.0
  %v1160 = vmax.f32 %v1144, 0.0
  %v1161 = vmax.f32 %v1145, 0.0
  %s1162 = scalar_lea.vmem %s3, 768
  %1163 = vst [vmem:[%s1162] sm:$0xff] %v1146
  %1164 = vst [vmem:[%s1162 + $0x8] sm:$0xff] %v1147
  %1165 = vst [vmem:[%s1162 + $0x10] sm:$0xff] %v1148
  %1166 = vst [vmem:[%s1162 + $0x18] sm:$0xff] %v1149
  %1167 = vst [vmem:[%s1162 + $0x20] sm:$0xff] %v1150
  %1168 = vst [vmem:[%s1162 + $0x28] sm:$0xff] %v1151
  %1169 = vst [vmem:[%s1162 + $0x30] sm:$0xff] %v1152
  %1170 = vst [vmem:[%s1162 + $0x38] sm:$0xff] %v1153
  %1171 = vst [vmem:[%s1162 + $0x40] sm:$0xff] %v1154
  %1172 = vst [vmem:[%s1162 + $0x48] sm:$0xff] %v1155
  %1173 = vst [vmem:[%s1162 + $0x50] sm:$0xff] %v1156
  %1174 = vst [vmem:[%s1162 + $0x58] sm:$0xff] %v1157
  %1175 = vst [vmem:[%s1162 + $0x60] sm:$0xff] %v1158
  %1176 = vst [vmem:[%s1162 + $0x68] sm:$0xff] %v1159
  %1177 = vst [vmem:[%s1162 + $0x70] sm:$0xff] %v1160
  %1178 = vst [vmem:[%s1162 + $0x78] sm:$0xff] %v1161
  %v1179 = vld [vmem:[%s324] sm:$0xff]
  %v1180 = vld [vmem:[%s324 + $0x8] sm:$0xff]
  %v1181 = vld [vmem:[%s324 + $0x10] sm:$0xff]
  %v1182 = vld [vmem:[%s324 + $0x18] sm:$0xff]
  %v1183 = vld [vmem:[%s324 + $0x20] sm:$0xff]
  %v1184 = vld [vmem:[%s324 + $0x28] sm:$0xff]
  %v1185 = vld [vmem:[%s324 + $0x30] sm:$0xff]
  %v1186 = vld [vmem:[%s324 + $0x38] sm:$0xff]
  %v1187 = vld [vmem:[%s324 + $0x40] sm:$0xff]
  %v1188 = vld [vmem:[%s324 + $0x48] sm:$0xff]
  %v1189 = vld [vmem:[%s324 + $0x50] sm:$0xff]
  %v1190 = vld [vmem:[%s324 + $0x58] sm:$0xff]
  %v1191 = vld [vmem:[%s324 + $0x60] sm:$0xff]
  %v1192 = vld [vmem:[%s324 + $0x68] sm:$0xff]
  %v1193 = vld [vmem:[%s324 + $0x70] sm:$0xff]
  %v1194 = vld [vmem:[%s324 + $0x78] sm:$0xff]
  %v1195 = vmul.f32 %v709, %v1179
  %v1196 = vmul.f32 %v709, %v1180
  %v1197 = vmul.f32 %v713, %v1181
  %v1198 = vmul.f32 %v713, %v1182
  %v1199 = vmul.f32 %v717, %v1183
  %v1200 = vmul.f32 %v717, %v1184
  %v1201 = vmul.f32 %v721, %v1185
  %v1202 = vmul.f32 %v721, %v1186
  %v1203 = vmul.f32 %v728, %v1187
  %v1204 = vmul.f32 %v728, %v1188
  %v1205 = vmul.f32 %v732, %v1189
  %v1206 = vmul.f32 %v732, %v1190
  %v1207 = vmul.f32 %v736, %v1191
  %v1208 = vmul.f32 %v736, %v1192
  %v1209 = vmul.f32 %v740, %v1193
  %v1210 = vmul.f32 %v740, %v1194
  %v1211 = vmax.f32 %v1195, 0.0
  %v1212 = vmax.f32 %v1196, 0.0
  %v1213 = vmax.f32 %v1197, 0.0
  %v1214 = vmax.f32 %v1198, 0.0
  %v1215 = vmax.f32 %v1199, 0.0
  %v1216 = vmax.f32 %v1200, 0.0
  %v1217 = vmax.f32 %v1201, 0.0
  %v1218 = vmax.f32 %v1202, 0.0
  %v1219 = vmax.f32 %v1203, 0.0
  %v1220 = vmax.f32 %v1204, 0.0
  %v1221 = vmax.f32 %v1205, 0.0
  %v1222 = vmax.f32 %v1206, 0.0
  %v1223 = vmax.f32 %v1207, 0.0
  %v1224 = vmax.f32 %v1208, 0.0
  %v1225 = vmax.f32 %v1209, 0.0
  %v1226 = vmax.f32 %v1210, 0.0
  %s1227 = scalar_lea.vmem %s3, 896
  %1228 = vst [vmem:[%s1227] sm:$0xff] %v1211
  %1229 = vst [vmem:[%s1227 + $0x8] sm:$0xff] %v1212
  %1230 = vst [vmem:[%s1227 + $0x10] sm:$0xff] %v1213
  %1231 = vst [vmem:[%s1227 + $0x18] sm:$0xff] %v1214
  %1232 = vst [vmem:[%s1227 + $0x20] sm:$0xff] %v1215
  %1233 = vst [vmem:[%s1227 + $0x28] sm:$0xff] %v1216
  %1234 = vst [vmem:[%s1227 + $0x30] sm:$0xff] %v1217
  %1235 = vst [vmem:[%s1227 + $0x38] sm:$0xff] %v1218
  %1236 = vst [vmem:[%s1227 + $0x40] sm:$0xff] %v1219
  %1237 = vst [vmem:[%s1227 + $0x48] sm:$0xff] %v1220
  %1238 = vst [vmem:[%s1227 + $0x50] sm:$0xff] %v1221
  %1239 = vst [vmem:[%s1227 + $0x58] sm:$0xff] %v1222
  %1240 = vst [vmem:[%s1227 + $0x60] sm:$0xff] %v1223
  %1241 = vst [vmem:[%s1227 + $0x68] sm:$0xff] %v1224
  %1242 = vst [vmem:[%s1227 + $0x70] sm:$0xff] %v1225
  %1243 = vst [vmem:[%s1227 + $0x78] sm:$0xff] %v1226
  // Predicated region
  $region14: #{ca_forward.1} parent=0 // pred_check
    _
  $region15: #{ca_forward.1} parent=0 // pred_check_branch
    %1245 = sbr.rel (0) target = $region17
  $region16: #{ca_forward.1} parent=0 // pred_region
    _
  $region17: #{ca_forward.1} parent=0 // pred_fallthru
    _
  // Predicated region
  $region18: #{ca_forward.1} parent=0 // pred_check
    _
  $region19: #{ca_forward.1} parent=0 // pred_check_branch
    %1247 = sbr.rel (0) target = $region21
  $region20: #{ca_forward.1} parent=0 // pred_region
    _
  $region21: #{ca_forward.1} parent=0 // pred_fallthru
    _

</llo_original>
